<compile_context>
chip_gen: v7x
topology: tpu7x:2x2x1
jax: 0.10.0
libtpu: 0.0.40
codegen_flags: <defaults>
</compile_context>

<pallas_src>
import functools

import jax
import jax.numpy as jnp
from jax import lax
from jax.experimental import pallas as pl
from jax.experimental.pallas import tpu as pltpu


# contract lhs dim 1 with rhs dim 1 (i.e. A @ B.T without materializing B.T)
_DIMS_NT = (((1,), (1,)), ((), ()))


def _net_fwd_kernel(x_ref, perm_ref, l1_ref, w1_ref, b1_ref,
                    l2_ref, w2_ref, b2_ref,
                    wfc_ref, mask_ref, bsel_ref, fold_ref, bfc_ref,
                    o_ref, *, k1, k2, eps):
    f32 = jnp.float32
    batch, c_in, v_in = x_ref.shape
    vp = perm_ref.shape[1]
    f1 = w1_ref.shape[0]
    n = batch * v_in

    # ---- BatchNorm1d(C, affine=False): training-mode batch statistics ------
    xs = [x_ref[b] for b in range(batch)]                      # each (C, V)
    tot = xs[0]
    for b in range(1, batch):
        tot = tot + xs[b]
    mean = jnp.sum(tot, axis=1, keepdims=True) / n             # (C, 1)
    sq = (xs[0] - mean) * (xs[0] - mean)
    for b in range(1, batch):
        sq = sq + (xs[b] - mean) * (xs[b] - mean)
    var = jnp.sum(sq, axis=1, keepdims=True) / n               # biased variance
    inv = lax.rsqrt(var + eps)                                 # (C, 1)

    xstk = jnp.concatenate(xs, axis=0)                         # (B*C, V)
    mean_t = jnp.concatenate([mean] * batch, axis=0)
    inv_t = jnp.concatenate([inv] * batch, axis=0)
    xn = (xstk - mean_t) * inv_t                               # (B*C, V)

    # ---- Permute: zero-pad V->Vp, then vertex reorder as one one-hot matmul
    pad = jnp.zeros((batch * c_in, vp - v_in), f32)
    xnp = jnp.concatenate([xn, pad], axis=1)                   # (B*C, Vp)
    iota_v = lax.broadcasted_iota(jnp.int32, (vp, vp), 0)
    psel = (perm_ref[...] == iota_v).astype(f32)               # psel[v, j] = (perm[j]==v)
    xp = jnp.dot(xnp, psel, preferred_element_type=f32)        # (B*C, Vp)

    def cheb_stack(s0, lmat, k):
        # S_0 = s0 ; S_j = 2 * S_{j-1} @ L^T - S_{j-2}   (rows are independent)
        ss = [s0]
        if k > 1:
            ss.append(lax.dot_general(s0, lmat, _DIMS_NT,
                                      preferred_element_type=f32))
        for _ in range(2, k):
            ss.append(2.0 * lax.dot_general(ss[-1], lmat, _DIMS_NT,
                                            preferred_element_type=f32) - ss[-2])
        return ss

    def relu_maxpool4(a):
        # ReLU then MaxPool1d(4, stride=4) over the lane axis (per-batch
        # blocks are multiples of 4 lanes wide so stride-4 windows never
        # cross a batch boundary; circular wrap only touches discarded lanes).
        nl = a.shape[1]
        r = jnp.maximum(a, 0.0)
        v_i = lax.broadcasted_iota(jnp.int32, (nl, nl // 4), 0)
        u_i = lax.broadcasted_iota(jnp.int32, (nl, nl // 4), 1)
        if nl % 128 == 0:
            # window max on XLU/VPU (rolls + max), ONE stride-4 selection matmul
            m = r
            for s in range(1, 4):
                # pltpu.roll matches jnp.roll; shift nl-s  <=>  result[v] = r[v+s]
                m = jnp.maximum(m, pltpu.roll(r, nl - s, 1))
            return jnp.dot(m, (v_i == 4 * u_i).astype(f32),
                           preferred_element_type=f32)
        # lane dim not a multiple of 128: keep the proven one-hot-select form
        y = jnp.dot(r, (v_i == 4 * u_i).astype(f32), preferred_element_type=f32)
        for s in range(1, 4):
            y = jnp.maximum(y, jnp.dot(r, (v_i == 4 * u_i + s).astype(f32),
                                       preferred_element_type=f32))
        return y

    # ---- Graph_Conv1 (both samples at once) --------------------------------
    l1 = l1_ref[...]
    s1_list = cheb_stack(xp, l1, k1)                           # each (B*C, Vp)
    blocks = [jnp.concatenate([s[b * c_in:(b + 1) * c_in, :] for b in range(batch)],
                              axis=1)
              for s in s1_list]                                # each (C, B*Vp)
    slab1 = jnp.concatenate(blocks, axis=0)                    # (K1*C, B*Vp)
    a1 = jnp.dot(w1_ref[...], slab1, preferred_element_type=f32) + b1_ref[...]
    y1 = relu_maxpool4(a1)                                     # (F1, B*V2)

    # ---- Graph_Conv2 (lane-stacked, block-diagonal Laplacian) --------------
    l2 = l2_ref[...]                                           # (B*V2, B*V2)
    s2_list = cheb_stack(y1, l2, k2)                           # each (F1, B*V2)
    slab2 = jnp.concatenate(s2_list, axis=0)                   # (K2*F1, B*V2)
    a2 = jnp.dot(w2_ref[...], slab2, preferred_element_type=f32) + b2_ref[...]
    y2 = relu_maxpool4(a2)                                     # (F2, B*V3)

    # ---- flatten + fc as one packed contraction (drop=0 -> dropout is id) --
    nbv3 = y2.shape[1]                                         # B*V3
    eye = (lax.broadcasted_iota(jnp.int32, (nbv3, nbv3), 0) ==
           lax.broadcasted_iota(jnp.int32, (nbv3, nbv3), 1)).astype(f32)
    yt = lax.dot_general(eye, y2, _DIMS_NT,
                         preferred_element_type=f32)           # (B*V3, F2) == y2.T
    p = jnp.dot(yt, wfc_ref[...], preferred_element_type=f32)  # (B*V3, V3*FC_F)
    masked = p * mask_ref[...]                                 # keep only u'==u terms
    out_pre = jnp.dot(bsel_ref[...], masked,
                      preferred_element_type=f32)              # (B, V3*FC_F)
    out = jnp.dot(out_pre, fold_ref[...],
                  preferred_element_type=f32) + bfc_ref[...]   # (B, FC_F)
    o_ref[...] = out.astype(o_ref.dtype)


def net_forward(x, params, eps=1e-5):
    """x: (B, C, V) float32 -> (B, FC_F). Whole forward pass in one kernel."""
    B, C, V = x.shape
    f32 = jnp.float32

    perm = params["perm"].astype(jnp.int32).reshape(1, -1)     # (1, Vp)
    Vp = perm.shape[1]
    K1, K2 = params["CL1_K"], params["CL2_K"]
    F1 = params["GCL1_w"].shape[0]
    F2 = params["GCL2_w"].shape[0]
    FC_F = params["fc_w"].shape[0]
    V2, V3 = Vp // 4, Vp // 16

    # ---- parameter-only repacking (no activation work in the wrapper) ------
    l1 = params["L0"].astype(f32)                              # (Vp, Vp)
    # block-diag Laplacian keeps both samples lane-stacked through conv2
    l2bd = jnp.kron(jnp.eye(B, dtype=f32), params["L2"].astype(f32))  # (B*V2, B*V2)

    # torch Linear weight W[f, c*K + k] -> packed Wp[f, k*Cin + c] (slab is k-major)
    w1p = jnp.transpose(params["GCL1_w"].reshape(F1, C, K1), (0, 2, 1)).reshape(F1, K1 * C)
    w2p = jnp.transpose(params["GCL2_w"].reshape(F2, F1, K2), (0, 2, 1)).reshape(F2, K2 * F1)
    b1 = params["GCL1_b"].reshape(F1, 1)
    b2 = params["GCL2_b"].reshape(F2, 1)
    # fc weight W[o, f*V3 + u] -> wfcp[f, u*FC_F + o]
    wfcp = jnp.transpose(params["fc_w"].reshape(FC_F, F2, V3), (1, 2, 0)).reshape(F2, V3 * FC_F)
    bfc = params["fc_b"].reshape(1, FC_F)

    # tiny constant tables for the fused FC epilogue (~8.5 KB total)
    j = jnp.arange(B * V3)
    c = jnp.arange(V3 * FC_F)
    fcmask = ((j[:, None] % V3) == (c[None, :] // FC_F)).astype(f32)      # (B*V3, V3*FC_F)
    bsel = ((j[None, :] // V3) == jnp.arange(B)[:, None]).astype(f32)     # (B, B*V3)
    fold = ((c[:, None] % FC_F) == jnp.arange(FC_F)[None, :]).astype(f32)  # (V3*FC_F, FC_F)

    inputs = (x.astype(f32), perm, l1, w1p, b1, l2bd, w2p, b2,
              wfcp, fcmask, bsel, fold, bfc)

    def full_spec(shape):
        zeros = (0,) * len(shape)
        return pl.BlockSpec(shape, lambda i, _z=zeros: _z)

    kernel = functools.partial(_net_fwd_kernel, k1=K1, k2=K2, eps=eps)
    return pl.pallas_call(
        kernel,
        out_shape=jax.ShapeDtypeStruct((B, FC_F), f32),
        grid=(1,),
        in_specs=[full_spec(a.shape) for a in inputs],
        out_specs=full_spec((B, FC_F)),
        compiler_params=pltpu.CompilerParams(
            dimension_semantics=("arbitrary",)),
    )(*inputs)


# ---------------------------------------------------------------------------
if __name__ == "__main__":
    B, IN_C, IN_V = 2, 4, 120
    CL1_F, CL1_K = 32, 3
    CL2_F, CL2_K = 64, 3
    FC_F = 10
    V_PERM = 128                                        # len(perm), divisible by 16
    FC_IN = CL2_F * V_PERM // 16                        # 512

    key = jax.random.PRNGKey(0)
    ks = jax.random.split(key, 8)

    def sym(k, nn, scale=0.1):                          # symmetric "rescaled Laplacian"
        a = jax.random.normal(k, (nn, nn), jnp.float32)
        return (a + a.T) * (0.5 * scale)

    s1 = (2.0 / (IN_C * CL1_K + CL1_F)) ** 0.5
    s2 = (2.0 / (CL1_F * CL2_K + CL2_F)) ** 0.5
    sfc = (2.0 / (FC_IN + FC_F)) ** 0.5

    params = {
        "perm": jax.random.permutation(ks[0], V_PERM),
        "L0": sym(ks[1], V_PERM),                       # Laplacian for conv1 (L[0])
        "L2": sym(ks[2], V_PERM // 4),                  # Laplacian for conv2 (L[2])
        "CL1_K": CL1_K,
        "CL2_K": CL2_K,
        "GCL1_w": jax.random.uniform(ks[3], (CL1_F, IN_C * CL1_K),
                                     jnp.float32, -s1, s1),
        "GCL1_b": jnp.zeros((CL1_F,), jnp.float32),
        "GCL2_w": jax.random.uniform(ks[4], (CL2_F, CL1_F * CL2_K),
                                     jnp.float32, -s2, s2),
        "GCL2_b": jnp.zeros((CL2_F,), jnp.float32),
        "fc_w": jax.random.uniform(ks[5], (FC_F, FC_IN),
                                   jnp.float32, -sfc, sfc),
        "fc_b": jnp.zeros((FC_F,), jnp.float32),        # fc.bias.fill_(0.0)
    }
    # TODO(synk): `self.sparse` parameter is declared but unused in Net.forward; not implemented.

    x = jax.random.normal(ks[6], (B, IN_C, IN_V), jnp.float32)
    out = jax.block_until_ready(net_forward(x, params))
    assert out.shape == (B, FC_F), out.shape
    print("KERNEL_OK")
</pallas_src>

<mosaic_0001>
module attributes {stable_mosaic.version = 11 : i64} {
  func.func @_net_fwd_kernel(%arg0: i32, %arg1: memref<2x4x120xf32, #tpu.memory_space<vmem>>, %arg2: memref<1x128xi32, #tpu.memory_space<vmem>>, %arg3: memref<128x128xf32, #tpu.memory_space<vmem>>, %arg4: memref<32x12xf32, #tpu.memory_space<vmem>>, %arg5: memref<32x1xf32, #tpu.memory_space<vmem>>, %arg6: memref<64x64xf32, #tpu.memory_space<vmem>>, %arg7: memref<64x96xf32, #tpu.memory_space<vmem>>, %arg8: memref<64x1xf32, #tpu.memory_space<vmem>>, %arg9: memref<64x80xf32, #tpu.memory_space<vmem>>, %arg10: memref<16x80xf32, #tpu.memory_space<vmem>>, %arg11: memref<2x16xf32, #tpu.memory_space<vmem>>, %arg12: memref<80x10xf32, #tpu.memory_space<vmem>>, %arg13: memref<1x10xf32, #tpu.memory_space<vmem>>, %arg14: memref<2x10xf32, #tpu.memory_space<vmem>>) attributes {dimension_semantics = [#tpu.dimension_semantics<arbitrary>], iteration_bounds = array<i64: 1>, scalar_prefetch = 0 : i64, scratch_operands = 0 : i64, tpu.core_type = #tpu.core_type<tc>, window_params = [{pipeline_mode = #tpu.pipeline_mode<synchronous>, transform_indices = @transform_0, window_bounds = array<i64: 2, 4, 120>}, {pipeline_mode = #tpu.pipeline_mode<synchronous>, transform_indices = @transform_1, window_bounds = array<i64: 1, 128>}, {pipeline_mode = #tpu.pipeline_mode<synchronous>, transform_indices = @transform_2, window_bounds = array<i64: 128, 128>}, {pipeline_mode = #tpu.pipeline_mode<synchronous>, transform_indices = @transform_3, window_bounds = array<i64: 32, 12>}, {pipeline_mode = #tpu.pipeline_mode<synchronous>, transform_indices = @transform_4, window_bounds = array<i64: 32, 1>}, {pipeline_mode = #tpu.pipeline_mode<synchronous>, transform_indices = @transform_5, window_bounds = array<i64: 64, 64>}, {pipeline_mode = #tpu.pipeline_mode<synchronous>, transform_indices = @transform_6, window_bounds = array<i64: 64, 96>}, {pipeline_mode = #tpu.pipeline_mode<synchronous>, transform_indices = @transform_7, window_bounds = array<i64: 64, 1>}, {pipeline_mode = #tpu.pipeline_mode<synchronous>, transform_indices = @transform_8, window_bounds = array<i64: 64, 80>}, {pipeline_mode = #tpu.pipeline_mode<synchronous>, transform_indices = @transform_9, window_bounds = array<i64: 16, 80>}, {pipeline_mode = #tpu.pipeline_mode<synchronous>, transform_indices = @transform_10, window_bounds = array<i64: 2, 16>}, {pipeline_mode = #tpu.pipeline_mode<synchronous>, transform_indices = @transform_11, window_bounds = array<i64: 80, 10>}, {pipeline_mode = #tpu.pipeline_mode<synchronous>, transform_indices = @transform_12, window_bounds = array<i64: 1, 10>}, {pipeline_mode = #tpu.pipeline_mode<synchronous>, transform_indices = @transform_13, window_bounds = array<i64: 2, 10>}]} {
    %c0 = arith.constant 0 : index
    %c0_0 = arith.constant 0 : index
    %c0_1 = arith.constant 0 : index
    %0 = vector.load %arg1[%c0, %c0_0, %c0_1] : memref<2x4x120xf32, #tpu.memory_space<vmem>>, vector<1x4x120xf32>
    %1 = vector.shape_cast %0 : vector<1x4x120xf32> to vector<4x120xf32>
    %c1 = arith.constant 1 : index
    %c0_2 = arith.constant 0 : index
    %c0_3 = arith.constant 0 : index
    %2 = vector.load %arg1[%c1, %c0_2, %c0_3] : memref<2x4x120xf32, #tpu.memory_space<vmem>>, vector<1x4x120xf32>
    %3 = vector.shape_cast %2 : vector<1x4x120xf32> to vector<4x120xf32>
    %4 = arith.addf %1, %3 : vector<4x120xf32>
    %cst = arith.constant dense<0.000000e+00> : vector<4xf32>
    %5 = vector.multi_reduction <add>, %4, %cst [1] : vector<4x120xf32> to vector<4xf32>
    %6 = vector.shape_cast %5 : vector<4xf32> to vector<4x1xf32>
    %cst_4 = arith.constant 2.400000e+02 : f32
    %7 = vector.broadcast %cst_4 : f32 to vector<4x1xf32>
    %8 = arith.divf %6, %7 : vector<4x1xf32>
    %9 = vector.broadcast %8 : vector<4x1xf32> to vector<4x120xf32>
    %10 = arith.subf %1, %9 : vector<4x120xf32>
    %11 = vector.broadcast %8 : vector<4x1xf32> to vector<4x120xf32>
    %12 = arith.subf %1, %11 : vector<4x120xf32>
    %13 = arith.mulf %10, %12 : vector<4x120xf32>
    %14 = vector.broadcast %8 : vector<4x1xf32> to vector<4x120xf32>
    %15 = arith.subf %3, %14 : vector<4x120xf32>
    %16 = vector.broadcast %8 : vector<4x1xf32> to vector<4x120xf32>
    %17 = arith.subf %3, %16 : vector<4x120xf32>
    %18 = arith.mulf %15, %17 : vector<4x120xf32>
    %19 = arith.addf %13, %18 : vector<4x120xf32>
    %cst_5 = arith.constant dense<0.000000e+00> : vector<4xf32>
    %20 = vector.multi_reduction <add>, %19, %cst_5 [1] : vector<4x120xf32> to vector<4xf32>
    %21 = vector.shape_cast %20 : vector<4xf32> to vector<4x1xf32>
    %cst_6 = arith.constant 2.400000e+02 : f32
    %22 = vector.broadcast %cst_6 : f32 to vector<4x1xf32>
    %23 = arith.divf %21, %22 : vector<4x1xf32>
    %cst_7 = arith.constant 9.99999974E-6 : f32
    %24 = vector.broadcast %cst_7 : f32 to vector<4x1xf32>
    %25 = arith.addf %23, %24 : vector<4x1xf32>
    %26 = math.rsqrt %25 : vector<4x1xf32>
    %27 = tpu.concatenate %1, %3 in 0 : vector<4x120xf32>, vector<4x120xf32> -> vector<8x120xf32>
    %28 = tpu.concatenate %8, %8 in 0 : vector<4x1xf32>, vector<4x1xf32> -> vector<8x1xf32>
    %29 = tpu.concatenate %26, %26 in 0 : vector<4x1xf32>, vector<4x1xf32> -> vector<8x1xf32>
    %30 = vector.broadcast %28 : vector<8x1xf32> to vector<8x120xf32>
    %31 = arith.subf %27, %30 : vector<8x120xf32>
    %32 = vector.broadcast %29 : vector<8x1xf32> to vector<8x120xf32>
    %33 = arith.mulf %31, %32 : vector<8x120xf32>
    %cst_8 = arith.constant 0.000000e+00 : f32
    %34 = vector.broadcast %cst_8 : f32 to vector<8x8xf32>
    %35 = tpu.concatenate %33, %34 in 1 : vector<8x120xf32>, vector<8x8xf32> -> vector<8x128xf32>
    %36 = tpu.iota {dimensions = array<i32: 0>} : vector<128x128xi32>
    %c0_9 = arith.constant 0 : index
    %c0_10 = arith.constant 0 : index
    %37 = vector.load %arg2[%c0_9, %c0_10] : memref<1x128xi32, #tpu.memory_space<vmem>>, vector<1x128xi32>
    %38 = vector.broadcast %37 : vector<1x128xi32> to vector<128x128xi32>
    %39 = arith.cmpi eq, %38, %36 : vector<128x128xi32>
    %40 = arith.extui %39 : vector<128x128xi1> to vector<128x128xi32>
    %41 = arith.sitofp %40 : vector<128x128xi32> to vector<128x128xf32>
    %cst_11 = arith.constant dense<0.000000e+00> : vector<8x128xf32>
    %42 = tpu.matmul %35, %41, %cst_11 {dimension_numbers = #tpu.dot_dimension_numbers<[1], [0], [0], [1], [0, 0, 1, 1], [], []>} : vector<8x128xf32>, vector<128x128xf32>, vector<8x128xf32> -> vector<8x128xf32>
    %c0_12 = arith.constant 0 : index
    %c0_13 = arith.constant 0 : index
    %43 = vector.load %arg3[%c0_12, %c0_13] : memref<128x128xf32, #tpu.memory_space<vmem>>, vector<128x128xf32>
    %cst_14 = arith.constant dense<0.000000e+00> : vector<8x128xf32>
    %44 = tpu.matmul %42, %43, %cst_14 {dimension_numbers = #tpu.dot_dimension_numbers<[1], [1], [0], [0], [0, 0, 1, 0], [], []>} : vector<8x128xf32>, vector<128x128xf32>, vector<8x128xf32> -> vector<8x128xf32>
    %cst_15 = arith.constant dense<0.000000e+00> : vector<8x128xf32>
    %45 = tpu.matmul %44, %43, %cst_15 {dimension_numbers = #tpu.dot_dimension_numbers<[1], [1], [0], [0], [0, 0, 1, 0], [], []>} : vector<8x128xf32>, vector<128x128xf32>, vector<8x128xf32> -> vector<8x128xf32>
    %cst_16 = arith.constant 2.000000e+00 : f32
    %46 = vector.broadcast %cst_16 : f32 to vector<8x128xf32>
    %47 = arith.mulf %46, %45 : vector<8x128xf32>
    %48 = arith.subf %47, %42 : vector<8x128xf32>
    %49 = vector.extract_strided_slice %42 {offsets = [0, 0], sizes = [4, 128], strides = [1, 1]} : vector<8x128xf32> to vector<4x128xf32>
    %50 = vector.extract_strided_slice %42 {offsets = [4, 0], sizes = [4, 128], strides = [1, 1]} : vector<8x128xf32> to vector<4x128xf32>
    %51 = tpu.concatenate %49, %50 in 1 : vector<4x128xf32>, vector<4x128xf32> -> vector<4x256xf32>
    %52 = vector.extract_strided_slice %44 {offsets = [0, 0], sizes = [4, 128], strides = [1, 1]} : vector<8x128xf32> to vector<4x128xf32>
    %53 = vector.extract_strided_slice %44 {offsets = [4, 0], sizes = [4, 128], strides = [1, 1]} : vector<8x128xf32> to vector<4x128xf32>
    %54 = tpu.concatenate %52, %53 in 1 : vector<4x128xf32>, vector<4x128xf32> -> vector<4x256xf32>
    %55 = vector.extract_strided_slice %48 {offsets = [0, 0], sizes = [4, 128], strides = [1, 1]} : vector<8x128xf32> to vector<4x128xf32>
    %56 = vector.extract_strided_slice %48 {offsets = [4, 0], sizes = [4, 128], strides = [1, 1]} : vector<8x128xf32> to vector<4x128xf32>
    %57 = tpu.concatenate %55, %56 in 1 : vector<4x128xf32>, vector<4x128xf32> -> vector<4x256xf32>
    %58 = tpu.concatenate %51, %54, %57 in 0 : vector<4x256xf32>, vector<4x256xf32>, vector<4x256xf32> -> vector<12x256xf32>
    %c0_17 = arith.constant 0 : index
    %c0_18 = arith.constant 0 : index
    %59 = vector.load %arg4[%c0_17, %c0_18] : memref<32x12xf32, #tpu.memory_space<vmem>>, vector<32x12xf32>
    %cst_19 = arith.constant dense<0.000000e+00> : vector<32x256xf32>
    %60 = tpu.matmul %59, %58, %cst_19 {dimension_numbers = #tpu.dot_dimension_numbers<[1], [0], [0], [1], [0, 0, 1, 1], [], []>} : vector<32x12xf32>, vector<12x256xf32>, vector<32x256xf32> -> vector<32x256xf32>
    %c0_20 = arith.constant 0 : index
    %c0_21 = arith.constant 0 : index
    %61 = vector.load %arg5[%c0_20, %c0_21] : memref<32x1xf32, #tpu.memory_space<vmem>>, vector<32x1xf32>
    %62 = vector.broadcast %61 : vector<32x1xf32> to vector<32x256xf32>
    %63 = arith.addf %60, %62 : vector<32x256xf32>
    %cst_22 = arith.constant 0.000000e+00 : f32
    %64 = vector.broadcast %cst_22 : f32 to vector<32x256xf32>
    %65 = arith.maximumf %63, %64 : vector<32x256xf32>
    %66 = tpu.iota {dimensions = array<i32: 0>} : vector<256x64xi32>
    %67 = tpu.iota {dimensions = array<i32: 1>} : vector<256x64xi32>
    %c255_i32 = arith.constant 255 : i32
    %68 = tpu.dynamic_rotate %65 by %c255_i32 dim 1 : vector<32x256xf32>, i32 -> vector<32x256xf32>
    %69 = arith.maximumf %65, %68 : vector<32x256xf32>
    %c254_i32 = arith.constant 254 : i32
    %70 = tpu.dynamic_rotate %65 by %c254_i32 dim 1 : vector<32x256xf32>, i32 -> vector<32x256xf32>
    %71 = arith.maximumf %69, %70 : vector<32x256xf32>
    %c253_i32 = arith.constant 253 : i32
    %72 = tpu.dynamic_rotate %65 by %c253_i32 dim 1 : vector<32x256xf32>, i32 -> vector<32x256xf32>
    %73 = arith.maximumf %71, %72 : vector<32x256xf32>
    %c4_i32 = arith.constant 4 : i32
    %74 = vector.broadcast %c4_i32 : i32 to vector<256x64xi32>
    %75 = arith.muli %74, %67 : vector<256x64xi32>
    %76 = arith.cmpi eq, %66, %75 : vector<256x64xi32>
    %77 = arith.extui %76 : vector<256x64xi1> to vector<256x64xi32>
    %78 = arith.sitofp %77 : vector<256x64xi32> to vector<256x64xf32>
    %cst_23 = arith.constant dense<0.000000e+00> : vector<32x64xf32>
    %79 = tpu.matmul %73, %78, %cst_23 {dimension_numbers = #tpu.dot_dimension_numbers<[1], [0], [0], [1], [0, 0, 1, 1], [], []>} : vector<32x256xf32>, vector<256x64xf32>, vector<32x64xf32> -> vector<32x64xf32>
    %c0_24 = arith.constant 0 : index
    %c0_25 = arith.constant 0 : index
    %80 = vector.load %arg6[%c0_24, %c0_25] : memref<64x64xf32, #tpu.memory_space<vmem>>, vector<64x64xf32>
    %cst_26 = arith.constant dense<0.000000e+00> : vector<32x64xf32>
    %81 = tpu.matmul %79, %80, %cst_26 {dimension_numbers = #tpu.dot_dimension_numbers<[1], [1], [0], [0], [0, 0, 1, 0], [], []>} : vector<32x64xf32>, vector<64x64xf32>, vector<32x64xf32> -> vector<32x64xf32>
    %cst_27 = arith.constant dense<0.000000e+00> : vector<32x64xf32>
    %82 = tpu.matmul %81, %80, %cst_27 {dimension_numbers = #tpu.dot_dimension_numbers<[1], [1], [0], [0], [0, 0, 1, 0], [], []>} : vector<32x64xf32>, vector<64x64xf32>, vector<32x64xf32> -> vector<32x64xf32>
    %cst_28 = arith.constant 2.000000e+00 : f32
    %83 = vector.broadcast %cst_28 : f32 to vector<32x64xf32>
    %84 = arith.mulf %83, %82 : vector<32x64xf32>
    %85 = arith.subf %84, %79 : vector<32x64xf32>
    %86 = tpu.concatenate %79, %81, %85 in 0 : vector<32x64xf32>, vector<32x64xf32>, vector<32x64xf32> -> vector<96x64xf32>
    %c0_29 = arith.constant 0 : index
    %c0_30 = arith.constant 0 : index
    %87 = vector.load %arg7[%c0_29, %c0_30] : memref<64x96xf32, #tpu.memory_space<vmem>>, vector<64x96xf32>
    %cst_31 = arith.constant dense<0.000000e+00> : vector<64x64xf32>
    %88 = tpu.matmul %87, %86, %cst_31 {dimension_numbers = #tpu.dot_dimension_numbers<[1], [0], [0], [1], [0, 0, 1, 1], [], []>} : vector<64x96xf32>, vector<96x64xf32>, vector<64x64xf32> -> vector<64x64xf32>
    %c0_32 = arith.constant 0 : index
    %c0_33 = arith.constant 0 : index
    %89 = vector.load %arg8[%c0_32, %c0_33] : memref<64x1xf32, #tpu.memory_space<vmem>>, vector<64x1xf32>
    %90 = vector.broadcast %89 : vector<64x1xf32> to vector<64x64xf32>
    %91 = arith.addf %88, %90 : vector<64x64xf32>
    %cst_34 = arith.constant 0.000000e+00 : f32
    %92 = vector.broadcast %cst_34 : f32 to vector<64x64xf32>
    %93 = arith.maximumf %91, %92 : vector<64x64xf32>
    %94 = tpu.iota {dimensions = array<i32: 0>} : vector<64x16xi32>
    %95 = tpu.iota {dimensions = array<i32: 1>} : vector<64x16xi32>
    %c4_i32_35 = arith.constant 4 : i32
    %96 = vector.broadcast %c4_i32_35 : i32 to vector<64x16xi32>
    %97 = arith.muli %96, %95 : vector<64x16xi32>
    %98 = arith.cmpi eq, %94, %97 : vector<64x16xi32>
    %99 = arith.extui %98 : vector<64x16xi1> to vector<64x16xi32>
    %100 = arith.sitofp %99 : vector<64x16xi32> to vector<64x16xf32>
    %cst_36 = arith.constant dense<0.000000e+00> : vector<64x16xf32>
    %101 = tpu.matmul %93, %100, %cst_36 {dimension_numbers = #tpu.dot_dimension_numbers<[1], [0], [0], [1], [0, 0, 1, 1], [], []>} : vector<64x64xf32>, vector<64x16xf32>, vector<64x16xf32> -> vector<64x16xf32>
    %c4_i32_37 = arith.constant 4 : i32
    %102 = vector.broadcast %c4_i32_37 : i32 to vector<64x16xi32>
    %103 = arith.muli %102, %95 : vector<64x16xi32>
    %c1_i32 = arith.constant 1 : i32
    %104 = vector.broadcast %c1_i32 : i32 to vector<64x16xi32>
    %105 = arith.addi %103, %104 : vector<64x16xi32>
    %106 = arith.cmpi eq, %94, %105 : vector<64x16xi32>
    %107 = arith.extui %106 : vector<64x16xi1> to vector<64x16xi32>
    %108 = arith.sitofp %107 : vector<64x16xi32> to vector<64x16xf32>
    %cst_38 = arith.constant dense<0.000000e+00> : vector<64x16xf32>
    %109 = tpu.matmul %93, %108, %cst_38 {dimension_numbers = #tpu.dot_dimension_numbers<[1], [0], [0], [1], [0, 0, 1, 1], [], []>} : vector<64x64xf32>, vector<64x16xf32>, vector<64x16xf32> -> vector<64x16xf32>
    %110 = arith.maximumf %101, %109 : vector<64x16xf32>
    %c4_i32_39 = arith.constant 4 : i32
    %111 = vector.broadcast %c4_i32_39 : i32 to vector<64x16xi32>
    %112 = arith.muli %111, %95 : vector<64x16xi32>
    %c2_i32 = arith.constant 2 : i32
    %113 = vector.broadcast %c2_i32 : i32 to vector<64x16xi32>
    %114 = arith.addi %112, %113 : vector<64x16xi32>
    %115 = arith.cmpi eq, %94, %114 : vector<64x16xi32>
    %116 = arith.extui %115 : vector<64x16xi1> to vector<64x16xi32>
    %117 = arith.sitofp %116 : vector<64x16xi32> to vector<64x16xf32>
    %cst_40 = arith.constant dense<0.000000e+00> : vector<64x16xf32>
    %118 = tpu.matmul %93, %117, %cst_40 {dimension_numbers = #tpu.dot_dimension_numbers<[1], [0], [0], [1], [0, 0, 1, 1], [], []>} : vector<64x64xf32>, vector<64x16xf32>, vector<64x16xf32> -> vector<64x16xf32>
    %119 = arith.maximumf %110, %118 : vector<64x16xf32>
    %c4_i32_41 = arith.constant 4 : i32
    %120 = vector.broadcast %c4_i32_41 : i32 to vector<64x16xi32>
    %121 = arith.muli %120, %95 : vector<64x16xi32>
    %c3_i32 = arith.constant 3 : i32
    %122 = vector.broadcast %c3_i32 : i32 to vector<64x16xi32>
    %123 = arith.addi %121, %122 : vector<64x16xi32>
    %124 = arith.cmpi eq, %94, %123 : vector<64x16xi32>
    %125 = arith.extui %124 : vector<64x16xi1> to vector<64x16xi32>
    %126 = arith.sitofp %125 : vector<64x16xi32> to vector<64x16xf32>
    %cst_42 = arith.constant dense<0.000000e+00> : vector<64x16xf32>
    %127 = tpu.matmul %93, %126, %cst_42 {dimension_numbers = #tpu.dot_dimension_numbers<[1], [0], [0], [1], [0, 0, 1, 1], [], []>} : vector<64x64xf32>, vector<64x16xf32>, vector<64x16xf32> -> vector<64x16xf32>
    %128 = arith.maximumf %119, %127 : vector<64x16xf32>
    %129 = tpu.iota {dimensions = array<i32: 0>} : vector<16x16xi32>
    %130 = tpu.iota {dimensions = array<i32: 1>} : vector<16x16xi32>
    %131 = arith.cmpi eq, %129, %130 : vector<16x16xi32>
    %132 = arith.extui %131 : vector<16x16xi1> to vector<16x16xi32>
    %133 = arith.sitofp %132 : vector<16x16xi32> to vector<16x16xf32>
    %cst_43 = arith.constant dense<0.000000e+00> : vector<16x64xf32>
    %134 = tpu.matmul %133, %128, %cst_43 {dimension_numbers = #tpu.dot_dimension_numbers<[1], [1], [0], [0], [0, 0, 1, 0], [], []>} : vector<16x16xf32>, vector<64x16xf32>, vector<16x64xf32> -> vector<16x64xf32>
    %c0_44 = arith.constant 0 : index
    %c0_45 = arith.constant 0 : index
    %135 = vector.load %arg9[%c0_44, %c0_45] : memref<64x80xf32, #tpu.memory_space<vmem>>, vector<64x80xf32>
    %cst_46 = arith.constant dense<0.000000e+00> : vector<16x80xf32>
    %136 = tpu.matmul %134, %135, %cst_46 {dimension_numbers = #tpu.dot_dimension_numbers<[1], [0], [0], [1], [0, 0, 1, 1], [], []>} : vector<16x64xf32>, vector<64x80xf32>, vector<16x80xf32> -> vector<16x80xf32>
    %c0_47 = arith.constant 0 : index
    %c0_48 = arith.constant 0 : index
    %137 = vector.load %arg10[%c0_47, %c0_48] : memref<16x80xf32, #tpu.memory_space<vmem>>, vector<16x80xf32>
    %138 = arith.mulf %136, %137 : vector<16x80xf32>
    %c0_49 = arith.constant 0 : index
    %c0_50 = arith.constant 0 : index
    %139 = vector.load %arg11[%c0_49, %c0_50] : memref<2x16xf32, #tpu.memory_space<vmem>>, vector<2x16xf32>
    %cst_51 = arith.constant dense<0.000000e+00> : vector<2x80xf32>
    %140 = tpu.matmul %139, %138, %cst_51 {dimension_numbers = #tpu.dot_dimension_numbers<[1], [0], [0], [1], [0, 0, 1, 1], [], []>} : vector<2x16xf32>, vector<16x80xf32>, vector<2x80xf32> -> vector<2x80xf32>
    %c0_52 = arith.constant 0 : index
    %c0_53 = arith.constant 0 : index
    %141 = vector.load %arg12[%c0_52, %c0_53] : memref<80x10xf32, #tpu.memory_space<vmem>>, vector<80x10xf32>
    %cst_54 = arith.constant dense<0.000000e+00> : vector<2x10xf32>
    %142 = tpu.matmul %140, %141, %cst_54 {dimension_numbers = #tpu.dot_dimension_numbers<[1], [0], [0], [1], [0, 0, 1, 1], [], []>} : vector<2x80xf32>, vector<80x10xf32>, vector<2x10xf32> -> vector<2x10xf32>
    %c0_55 = arith.constant 0 : index
    %c0_56 = arith.constant 0 : index
    %143 = vector.load %arg13[%c0_55, %c0_56] : memref<1x10xf32, #tpu.memory_space<vmem>>, vector<1x10xf32>
    %144 = vector.broadcast %143 : vector<1x10xf32> to vector<2x10xf32>
    %145 = arith.addf %142, %144 : vector<2x10xf32>
    %c0_57 = arith.constant 0 : index
    %c0_58 = arith.constant 0 : index
    %146 = vector.load %arg14[%c0_57, %c0_58] : memref<2x10xf32, #tpu.memory_space<vmem>>, vector<2x10xf32>
    tpu.vector_store %arg14[%c0_57, %c0_58], %145 {strides = array<i32>} : memref<2x10xf32, #tpu.memory_space<vmem>>, vector<2x10xf32>,
    return
  }
  func.func @transform_0(%arg0: i32) -> (i32, i32, i32) {
    %c0_i32 = arith.constant 0 : i32
    %c0_i32_0 = arith.constant 0 : i32
    %c0_i32_1 = arith.constant 0 : i32
    %c0_i32_2 = arith.constant 0 : i32
    return %c0_i32, %c0_i32_0, %c0_i32_1 : i32, i32, i32
  }
  func.func @transform_1(%arg0: i32) -> (i32, i32) {
    %c0_i32 = arith.constant 0 : i32
    %c0_i32_0 = arith.constant 0 : i32
    %c0_i32_1 = arith.constant 0 : i32
    return %c0_i32, %c0_i32_0 : i32, i32
  }
  func.func @transform_2(%arg0: i32) -> (i32, i32) {
    %c0_i32 = arith.constant 0 : i32
    %c0_i32_0 = arith.constant 0 : i32
    %c0_i32_1 = arith.constant 0 : i32
    return %c0_i32, %c0_i32_0 : i32, i32
  }
  func.func @transform_3(%arg0: i32) -> (i32, i32) {
    %c0_i32 = arith.constant 0 : i32
    %c0_i32_0 = arith.constant 0 : i32
    %c0_i32_1 = arith.constant 0 : i32
    return %c0_i32, %c0_i32_0 : i32, i32
  }
  func.func @transform_4(%arg0: i32) -> (i32, i32) {
    %c0_i32 = arith.constant 0 : i32
    %c0_i32_0 = arith.constant 0 : i32
    %c0_i32_1 = arith.constant 0 : i32
    return %c0_i32, %c0_i32_0 : i32, i32
  }
  func.func @transform_5(%arg0: i32) -> (i32, i32) {
    %c0_i32 = arith.constant 0 : i32
    %c0_i32_0 = arith.constant 0 : i32
    %c0_i32_1 = arith.constant 0 : i32
    return %c0_i32, %c0_i32_0 : i32, i32
  }
  func.func @transform_6(%arg0: i32) -> (i32, i32) {
    %c0_i32 = arith.constant 0 : i32
    %c0_i32_0 = arith.constant 0 : i32
    %c0_i32_1 = arith.constant 0 : i32
    return %c0_i32, %c0_i32_0 : i32, i32
  }
  func.func @transform_7(%arg0: i32) -> (i32, i32) {
    %c0_i32 = arith.constant 0 : i32
    %c0_i32_0 = arith.constant 0 : i32
    %c0_i32_1 = arith.constant 0 : i32
    return %c0_i32, %c0_i32_0 : i32, i32
  }
  func.func @transform_8(%arg0: i32) -> (i32, i32) {
    %c0_i32 = arith.constant 0 : i32
    %c0_i32_0 = arith.constant 0 : i32
    %c0_i32_1 = arith.constant 0 : i32
    return %c0_i32, %c0_i32_0 : i32, i32
  }
  func.func @transform_9(%arg0: i32) -> (i32, i32) {
    %c0_i32 = arith.constant 0 : i32
    %c0_i32_0 = arith.constant 0 : i32
    %c0_i32_1 = arith.constant 0 : i32
    return %c0_i32, %c0_i32_0 : i32, i32
  }
  func.func @transform_10(%arg0: i32) -> (i32, i32) {
    %c0_i32 = arith.constant 0 : i32
    %c0_i32_0 = arith.constant 0 : i32
    %c0_i32_1 = arith.constant 0 : i32
    return %c0_i32, %c0_i32_0 : i32, i32
  }
  func.func @transform_11(%arg0: i32) -> (i32, i32) {
    %c0_i32 = arith.constant 0 : i32
    %c0_i32_0 = arith.constant 0 : i32
    %c0_i32_1 = arith.constant 0 : i32
    return %c0_i32, %c0_i32_0 : i32, i32
  }
  func.func @transform_12(%arg0: i32) -> (i32, i32) {
    %c0_i32 = arith.constant 0 : i32
    %c0_i32_0 = arith.constant 0 : i32
    %c0_i32_1 = arith.constant 0 : i32
    return %c0_i32, %c0_i32_0 : i32, i32
  }
  func.func @transform_13(%arg0: i32) -> (i32, i32) {
    %c0_i32 = arith.constant 0 : i32
    %c0_i32_0 = arith.constant 0 : i32
    %c0_i32_1 = arith.constant 0 : i32
    return %c0_i32, %c0_i32_0 : i32, i32
  }
}

</mosaic_0001>

<llo_original>
// kernel: tpu_custom_call.1
$region0: #{tpu_custom_call.1}
  #allocation0 [shape = 'u32[]', space=smem, size = 0x4, offset = 0x4, fixed_abs, tag = 'smem constant byte address 0x4 - core index']
  #allocation1 [shape = 'u32[144,128]{1,0:T(1,128)}', space=vmem, size = 0x12000, scoped, tag = 'internal scratch']
  %s0 = inlined_call_operand.hbm [shape: f32[2,4,120], index: 0, kind: input, shape index: {}]
  %s1 = inlined_call_operand.hbm [shape: s32[1,128], index: 1, kind: input, shape index: {}]
  %s2 = inlined_call_operand.vmem [shape: f32[128,128], index: 2, kind: input, shape index: {}]
  %s3 = inlined_call_operand.vmem [shape: f32[32,12], index: 3, kind: input, shape index: {}]
  %s4 = inlined_call_operand.vmem [shape: f32[32,1], index: 4, kind: input, shape index: {}]
  %s5 = inlined_call_operand.vmem [shape: f32[64,64], index: 5, kind: input, shape index: {}]
  %s6 = inlined_call_operand.vmem [shape: f32[64,96], index: 6, kind: input, shape index: {}]
  %s7 = inlined_call_operand.vmem [shape: f32[64,1], index: 7, kind: input, shape index: {}]
  %s8 = inlined_call_operand.hbm [shape: f32[64,80], index: 8, kind: input, shape index: {}]
  %s9 = inlined_call_operand.vmem [shape: f32[16,80], index: 9, kind: input, shape index: {}]
  %s10 = inlined_call_operand.vmem [shape: f32[2,16], index: 10, kind: input, shape index: {}]
  %s11 = inlined_call_operand.vmem [shape: f32[80,10], index: 11, kind: input, shape index: {}]
  %s12 = inlined_call_operand.vmem [shape: f32[1,10], index: 12, kind: input, shape index: {}]
  %s13 = inlined_call_operand.hbm [shape: f32[2,10], index: 13, kind: output, shape index: {}]
  %s14 = sld [smem:[#allocation0]]
  $region74: #{tpu_custom_call.1} parent=0
    _
  %s16 = ssub.s32 1, %s14
  %s17 = scalar_select 0, %s16, %s14
  $region1: #{tpu_custom_call.1} parent=0
    #allocation2 [shape = 'u8[4096]{0}', space=vmem, size = 0x1000, scoped, tag = 'input window, operand 0, single buffered']
    #allocation3 [shape = 's32[1]{0}', space=sflag, size = 0x4, scoped, tag = 'scoped memory for tpu_custom_call.1']
    #allocation4 [shape = 's32[1]{0}', space=sflag, size = 0x4, scoped, tag = 'scoped memory for tpu_custom_call.1']
    #allocation5 [shape = 'u8[512]{0}', space=vmem, size = 0x400, scoped, tag = 'input window, operand 1, single buffered']
    #allocation6 [shape = 's32[1]{0}', space=sflag, size = 0x4, scoped, tag = 'scoped memory for tpu_custom_call.1']
    #allocation7 [shape = 'u8[32768]{0}', space=vmem, size = 0x8000, scoped, tag = 'input window, operand 8, single buffered']
    #allocation8 [shape = 'u8[1024]{0}', space=vmem, size = 0x400, scoped, tag = 'output window, operand 0, single buffered']
    %18 = vsyncpa [#allocation3], 0
    %19 = vsyncpa [#allocation6], 0
    %20 = vsyncpa [#allocation4], 0
    // Predicated region
    $region2: #{tpu_custom_call.1} parent=1 // pred_check
      _
    $region3: #{tpu_custom_call.1} parent=1 // pred_check_branch
      %22 = sbr.rel (0) target = $region5
    $region4: #{tpu_custom_call.1} parent=1 // pred_region
      %s24 = ssub.s32 128, 128
      %25 = vsyncadd [#allocation3], %s24
      %s26 = sshll.u32 [#allocation2], 4
      %s27 = int_to_ptr.vmem [resolvable:$true] %s26
      %32 = dma.hbm_to_vmem [thread:$0]  %s0, 128, %s27, [#allocation3], 64, 64, 4
    $region5: #{tpu_custom_call.1} parent=1 // pred_fallthru
      _
    // Predicated region
    $region6: #{tpu_custom_call.1} parent=1 // pred_check
      _
    $region7: #{tpu_custom_call.1} parent=1 // pred_check_branch
      %34 = sbr.rel (0) target = $region9
    $region8: #{tpu_custom_call.1} parent=1 // pred_region
      %s36 = ssub.s32 16, 16
      %37 = vsyncadd [#allocation6], %s36
      %s39 = sshll.u32 [#allocation5], 4
      %s40 = int_to_ptr.vmem [resolvable:$true] %s39
      %42 = dma.hbm_to_vmem [thread:$0]  %s1, 16, %s40, [#allocation6]
    $region9: #{tpu_custom_call.1} parent=1 // pred_fallthru
      _
    // Predicated region
    $region10: #{tpu_custom_call.1} parent=1 // pred_check
      _
    $region11: #{tpu_custom_call.1} parent=1 // pred_check_branch
      %44 = sbr.rel (0) target = $region13
    $region12: #{tpu_custom_call.1} parent=1 // pred_region
      _
    $region13: #{tpu_custom_call.1} parent=1 // pred_fallthru
      _
    // Predicated region
    $region14: #{tpu_custom_call.1} parent=1 // pred_check
      _
    $region15: #{tpu_custom_call.1} parent=1 // pred_check_branch
      %46 = sbr.rel (0) target = $region17
    $region16: #{tpu_custom_call.1} parent=1 // pred_region
      _
    $region17: #{tpu_custom_call.1} parent=1 // pred_fallthru
      _
    // Predicated region
    $region18: #{tpu_custom_call.1} parent=1 // pred_check
      _
    $region19: #{tpu_custom_call.1} parent=1 // pred_check_branch
      %48 = sbr.rel (0) target = $region21
    $region20: #{tpu_custom_call.1} parent=1 // pred_region
      _
    $region21: #{tpu_custom_call.1} parent=1 // pred_fallthru
      _
    // Predicated region
    $region22: #{tpu_custom_call.1} parent=1 // pred_check
      _
    $region23: #{tpu_custom_call.1} parent=1 // pred_check_branch
      %50 = sbr.rel (0) target = $region25
    $region24: #{tpu_custom_call.1} parent=1 // pred_region
      _
    $region25: #{tpu_custom_call.1} parent=1 // pred_fallthru
      _
    // Predicated region
    $region26: #{tpu_custom_call.1} parent=1 // pred_check
      _
    $region27: #{tpu_custom_call.1} parent=1 // pred_check_branch
      %52 = sbr.rel (0) target = $region29
    $region28: #{tpu_custom_call.1} parent=1 // pred_region
      _
    $region29: #{tpu_custom_call.1} parent=1 // pred_fallthru
      _
    // Predicated region
    $region30: #{tpu_custom_call.1} parent=1 // pred_check
      _
    $region31: #{tpu_custom_call.1} parent=1 // pred_check_branch
      %54 = sbr.rel (0) target = $region33
    $region32: #{tpu_custom_call.1} parent=1 // pred_region
      _
    $region33: #{tpu_custom_call.1} parent=1 // pred_fallthru
      _
    // Predicated region
    $region34: #{tpu_custom_call.1} parent=1 // pred_check
      _
    $region35: #{tpu_custom_call.1} parent=1 // pred_check_branch
      %56 = sbr.rel (0) target = $region37
    $region36: #{tpu_custom_call.1} parent=1 // pred_region
      %s58 = ssub.s32 1024, 1024
      %59 = vsyncadd [#allocation6], %s58
      %s60 = sshll.u32 [#allocation7], 4
      %s61 = int_to_ptr.vmem [resolvable:$true] %s60
      %66 = dma.hbm_to_vmem [thread:$0]  %s8, 1024, %s61, [#allocation6], 128, 128, 8
    $region37: #{tpu_custom_call.1} parent=1 // pred_fallthru
      _
    // Predicated region
    $region38: #{tpu_custom_call.1} parent=1 // pred_check
      _
    $region39: #{tpu_custom_call.1} parent=1 // pred_check_branch
      %68 = sbr.rel (0) target = $region41
    $region40: #{tpu_custom_call.1} parent=1 // pred_region
      _
    $region41: #{tpu_custom_call.1} parent=1 // pred_fallthru
      _
    // Predicated region
    $region42: #{tpu_custom_call.1} parent=1 // pred_check
      _
    $region43: #{tpu_custom_call.1} parent=1 // pred_check_branch
      %70 = sbr.rel (0) target = $region45
    $region44: #{tpu_custom_call.1} parent=1 // pred_region
      _
    $region45: #{tpu_custom_call.1} parent=1 // pred_fallthru
      _
    // Predicated region
    $region46: #{tpu_custom_call.1} parent=1 // pred_check
      _
    $region47: #{tpu_custom_call.1} parent=1 // pred_check_branch
      %72 = sbr.rel (0) target = $region49
    $region48: #{tpu_custom_call.1} parent=1 // pred_region
      _
    $region49: #{tpu_custom_call.1} parent=1 // pred_fallthru
      _
    // Predicated region
    $region50: #{tpu_custom_call.1} parent=1 // pred_check
      _
    $region51: #{tpu_custom_call.1} parent=1 // pred_check_branch
      %74 = sbr.rel (0) target = $region53
    $region52: #{tpu_custom_call.1} parent=1 // pred_region
      _
    $region53: #{tpu_custom_call.1} parent=1 // pred_fallthru
      _
    // Predicated region
    $region54: #{tpu_custom_call.1} parent=1 // pred_check
      _
    $region55: #{tpu_custom_call.1} parent=1 // pred_check_branch
      %76 = sbr.rel (0) target = $region57
    $region56: #{tpu_custom_call.1} parent=1 // pred_region
      %77 = dma.done [#allocation3], 128
    $region57: #{tpu_custom_call.1} parent=1 // pred_fallthru
      _
    // Predicated region
    $region58: #{tpu_custom_call.1} parent=1 // pred_check
      _
    $region59: #{tpu_custom_call.1} parent=1 // pred_check_branch
      %79 = sbr.rel (0) target = $region61
    $region60: #{tpu_custom_call.1} parent=1 // pred_region
      %80 = dma.done [#allocation6], 16
    $region61: #{tpu_custom_call.1} parent=1 // pred_fallthru
      _
    // Predicated region
    $region62: #{tpu_custom_call.1} parent=1 // pred_check
      _
    $region63: #{tpu_custom_call.1} parent=1 // pred_check_branch
      %82 = sbr.rel (0) target = $region65
    $region64: #{tpu_custom_call.1} parent=1 // pred_region
      %83 = dma.done [#allocation6], 1024
    $region65: #{tpu_custom_call.1} parent=1 // pred_fallthru
      _
    %v84 = vld [vmem:[#allocation2] sm:$0xf]
    %s85 = scalar_lea.vmem [#allocation2], 4
    %v86 = vld [vmem:[%s85] sm:$0xf]
    %v87 = vadd.f32 %v84, %v86
    %vm88 = vcmask 977920
    %v89 = vsel %vm88, %v87, 0.0
    %90 = vadd.xlane.f32.xlu0 %v89
    %v91 = vpop.xlane.xlu0 %90
    %v92 = vrcp.pop 240.0
    %v93 = vmul.f32 %v91, %v92
    %v94 = vsub.f32 %v84, %v93
    %v95 = vmul.f32 %v94, %v94
    %v96 = vsub.f32 %v86, %v93
    %v97 = vmul.f32 %v96, %v96
    %v98 = vadd.f32 %v95, %v97
    %v99 = vsel %vm88, %v98, 0.0
    %100 = vadd.xlane.f32.xlu0 %v99
    %v101 = vpop.xlane.xlu0 %100
    %v102 = vmul.f32 %v101, %v92
    %v103 = vadd.f32 %v102, 1e-05
    %v104 = vrsqrt.pop %v103
    %v106 = vrot.slane %v86, 4
    %vm108 = vcmask 1043456
    %v109 = vsel %vm108, %v84, %v106
    %v111 = vrot.slane %v93, 4
    %v113 = vsel %vm108, %v93, %v111
    %v115 = vrot.slane %v104, 4
    %v117 = vsel %vm108, %v104, %v115
    %119 = vset.pattern.permute.xlu0 0
    %120 = vperm.xlu0 %119, %v113
    %v121 = vpop.permute.xlu0 %120
    %v123 = vsub.f32 %v109, %v121
    %125 = vset.pattern.permute.xlu0 0
    %126 = vperm.xlu0 %125, %v117
    %v127 = vpop.permute.xlu0 %126
    %v129 = vmul.f32 %v123, %v127
    %vm130 = vcmask 982016
    %v131 = vsel %vm130, %v129, 0.0
    %v132 = vlaneseq
    %v133 = vshrl.u32 %v132, 7
    %v134 = vadd.s32 %v133, 8
    %v135 = vadd.s32 %v133, 16
    %v136 = vadd.s32 %v133, 24
    %v137 = vadd.s32 %v133, 32
    %v138 = vadd.s32 %v133, 40
    %v139 = vadd.s32 %v133, 48
    %v140 = vadd.s32 %v133, 56
    %v141 = vadd.s32 %v133, 64
    %v142 = vadd.s32 %v133, 72
    %v143 = vadd.s32 %v133, 80
    %v144 = vadd.s32 %v133, 88
    %v145 = vadd.s32 %v133, 96
    %v146 = vadd.s32 %v133, 104
    %v147 = vadd.s32 %v133, 112
    %v148 = vadd.s32 %v133, 120
    %v149 = vld [vmem:[#allocation5] sm:$0x1]
    %v150 = vlaneseq
    %v151 = vshrl.u32 %v150, 7
    %v152 = vsub.s32 0, %v151
    %v153 = vrot.slane %v149, %v152
    %vm154 = vcmp.eq.s32.totalorder %v153, %v133
    %vm155 = vcmp.eq.s32.totalorder %v153, %v134
    %vm156 = vcmp.eq.s32.totalorder %v153, %v135
    %vm157 = vcmp.eq.s32.totalorder %v153, %v136
    %vm158 = vcmp.eq.s32.totalorder %v153, %v137
    %vm159 = vcmp.eq.s32.totalorder %v153, %v138
    %vm160 = vcmp.eq.s32.totalorder %v153, %v139
    %vm161 = vcmp.eq.s32.totalorder %v153, %v140
    %vm162 = vcmp.eq.s32.totalorder %v153, %v141
    %vm163 = vcmp.eq.s32.totalorder %v153, %v142
    %vm164 = vcmp.eq.s32.totalorder %v153, %v143
    %vm165 = vcmp.eq.s32.totalorder %v153, %v144
    %vm166 = vcmp.eq.s32.totalorder %v153, %v145
    %vm167 = vcmp.eq.s32.totalorder %v153, %v146
    %vm168 = vcmp.eq.s32.totalorder %v153, %v147
    %vm169 = vcmp.eq.s32.totalorder %v153, %v148
    %v170 = vsel %vm154, 1, 0
    %v171 = vsel %vm155, 1, 0
    %v172 = vsel %vm156, 1, 0
    %v173 = vsel %vm157, 1, 0
    %v174 = vsel %vm158, 1, 0
    %v175 = vsel %vm159, 1, 0
    %v176 = vsel %vm160, 1, 0
    %v177 = vsel %vm161, 1, 0
    %v178 = vsel %vm162, 1, 0
    %v179 = vsel %vm163, 1, 0
    %v180 = vsel %vm164, 1, 0
    %v181 = vsel %vm165, 1, 0
    %v182 = vsel %vm166, 1, 0
    %v183 = vsel %vm167, 1, 0
    %v184 = vsel %vm168, 1, 0
    %v185 = vsel %vm169, 1, 0
    %v186 = vcvt.s32.f32 %v170
    %v187 = vcvt.s32.f32 %v171
    %v188 = vcvt.s32.f32 %v172
    %v189 = vcvt.s32.f32 %v173
    %v190 = vcvt.s32.f32 %v174
    %v191 = vcvt.s32.f32 %v175
    %v192 = vcvt.s32.f32 %v176
    %v193 = vcvt.s32.f32 %v177
    %v194 = vcvt.s32.f32 %v178
    %v195 = vcvt.s32.f32 %v179
    %v196 = vcvt.s32.f32 %v180
    %v197 = vcvt.s32.f32 %v181
    %v198 = vcvt.s32.f32 %v182
    %v199 = vcvt.s32.f32 %v183
    %v200 = vcvt.s32.f32 %v184
    %v201 = vcvt.s32.f32 %v185
    %202 = vmatprep.subr.mxu0 0.0
    %203 = vmatpush1.msra.mxu0 %v186
    %204 = vmatprep.subr.mxu0 0.0
    %205 = vmatpush1.msra.mxu0 %v187
    %206 = vmatprep.subr.mxu0 0.0
    %207 = vmatpush1.msra.mxu0 %v188
    %208 = vmatprep.subr.mxu0 0.0
    %209 = vmatpush1.msra.mxu0 %v189
    %210 = vmatprep.subr.mxu0 0.0
    %211 = vmatpush1.msra.mxu0 %v190
    %212 = vmatprep.subr.mxu0 0.0
    %213 = vmatpush1.msra.mxu0 %v191
    %214 = vmatprep.subr.mxu0 0.0
    %215 = vmatpush1.msra.mxu0 %v192
    %216 = vmatprep.subr.mxu0 0.0
    %217 = vmatpush1.msra.mxu0 %v193
    %218 = vmatprep.subr.mxu0 0.0
    %219 = vmatpush1.msra.mxu0 %v194
    %220 = vmatprep.subr.mxu0 0.0
    %221 = vmatpush1.msra.mxu0 %v195
    %222 = vmatprep.subr.mxu0 0.0
    %223 = vmatpush1.msra.mxu0 %v196
    %224 = vmatprep.subr.mxu0 0.0
    %225 = vmatpush1.msra.mxu0 %v197
    %226 = vmatprep.subr.mxu0 0.0
    %227 = vmatpush1.msra.mxu0 %v198
    %228 = vmatprep.subr.mxu0 0.0
    %229 = vmatpush1.msra.mxu0 %v199
    %230 = vmatprep.subr.mxu0 0.0
    %231 = vmatpush1.msra.mxu0 %v200
    %232 = vmatprep.subr.mxu0 0.0
    %233 = vmatpush1.msra.mxu0 %v201
    %234 = vmatprep.subr.mxu0 0.0
    %235 = vmatpush1.msra.mxu0 0.0
    %236 = vmatprep.subr.mxu0 0.0
    %237 = vmatpush1.msra.mxu0 0.0
    %238 = vmatprep.subr.mxu0 0.0
    %239 = vmatpush1.msra.mxu0 0.0
    %240 = vmatprep.subr.mxu0 0.0
    %241 = vmatpush1.msra.mxu0 0.0
    %242 = vmatprep.subr.mxu0 0.0
    %243 = vmatpush1.msra.mxu0 0.0
    %244 = vmatprep.subr.mxu0 0.0
    %245 = vmatpush1.msra.mxu0 0.0
    %246 = vmatprep.subr.mxu0 0.0
    %247 = vmatpush1.msra.mxu0 0.0
    %248 = vmatprep.subr.mxu0 0.0
    %249 = vmatpush1.msra.mxu0 0.0
    %250 = vmatprep.subr.mxu0 0.0
    %251 = vmatpush1.msra.mxu0 0.0
    %252 = vmatprep.subr.mxu0 0.0
    %253 = vmatpush1.msra.mxu0 0.0
    %254 = vmatprep.subr.mxu0 0.0
    %255 = vmatpush1.msra.mxu0 0.0
    %256 = vmatprep.subr.mxu0 0.0
    %257 = vmatpush1.msra.mxu0 0.0
    %258 = vmatprep.subr.mxu0 0.0
    %259 = vmatpush1.msra.mxu0 0.0
    %260 = vmatprep.subr.mxu0 0.0
    %261 = vmatpush1.msra.mxu0 0.0
    %262 = vmatprep.subr.mxu0 0.0
    %263 = vmatpush1.msra.mxu0 0.0
    %264 = vmatprep.subr.mxu0 0.0
    %265 = vmatpush1.msra.mxu0 0.0
    %266 = vmatprep.mubr.f32.mxu0 0.0
    %267 = vmatmul.mubr.f32.gmra.mrb[0].mxu0 %v131
    %v268 = vpop.f32.mrb[0].mxu0
    %v269 = vadd.f32 0.0, %v268
    %v270 = vpop.f32.mrb[0].mxu0
    %271 = vdwg.mxu0
    %v272 = vld [vmem:[%s2] sm:$0xff]
    %v273 = vld [vmem:[%s2 + $0x8] sm:$0xff]
    %v274 = vld [vmem:[%s2 + $0x10] sm:$0xff]
    %v275 = vld [vmem:[%s2 + $0x18] sm:$0xff]
    %v276 = vld [vmem:[%s2 + $0x20] sm:$0xff]
    %v277 = vld [vmem:[%s2 + $0x28] sm:$0xff]
    %v278 = vld [vmem:[%s2 + $0x30] sm:$0xff]
    %v279 = vld [vmem:[%s2 + $0x38] sm:$0xff]
    %v280 = vld [vmem:[%s2 + $0x40] sm:$0xff]
    %v281 = vld [vmem:[%s2 + $0x48] sm:$0xff]
    %v282 = vld [vmem:[%s2 + $0x50] sm:$0xff]
    %v283 = vld [vmem:[%s2 + $0x58] sm:$0xff]
    %v284 = vld [vmem:[%s2 + $0x60] sm:$0xff]
    %v285 = vld [vmem:[%s2 + $0x68] sm:$0xff]
    %v286 = vld [vmem:[%s2 + $0x70] sm:$0xff]
    %v287 = vld [vmem:[%s2 + $0x78] sm:$0xff]
    %288 = vmatprep.subr.mxu0 0.0
    %289 = vmatpush1.xpose.msra.mxu0 %v272
    %290 = vmatprep.subr.mxu0 0.0
    %291 = vmatpush1.xpose.msra.mxu0 %v273
    %292 = vmatprep.subr.mxu0 0.0
    %293 = vmatpush1.xpose.msra.mxu0 %v274
    %294 = vmatprep.subr.mxu0 0.0
    %295 = vmatpush1.xpose.msra.mxu0 %v275
    %296 = vmatprep.subr.mxu0 0.0
    %297 = vmatpush1.xpose.msra.mxu0 %v276
    %298 = vmatprep.subr.mxu0 0.0
    %299 = vmatpush1.xpose.msra.mxu0 %v277
    %300 = vmatprep.subr.mxu0 0.0
    %301 = vmatpush1.xpose.msra.mxu0 %v278
    %302 = vmatprep.subr.mxu0 0.0
    %303 = vmatpush1.xpose.msra.mxu0 %v279
    %304 = vmatprep.subr.mxu0 0.0
    %305 = vmatpush1.xpose.msra.mxu0 %v280
    %306 = vmatprep.subr.mxu0 0.0
    %307 = vmatpush1.xpose.msra.mxu0 %v281
    %308 = vmatprep.subr.mxu0 0.0
    %309 = vmatpush1.xpose.msra.mxu0 %v282
    %310 = vmatprep.subr.mxu0 0.0
    %311 = vmatpush1.xpose.msra.mxu0 %v283
    %312 = vmatprep.subr.mxu0 0.0
    %313 = vmatpush1.xpose.msra.mxu0 %v284
    %314 = vmatprep.subr.mxu0 0.0
    %315 = vmatpush1.xpose.msra.mxu0 %v285
    %316 = vmatprep.subr.mxu0 0.0
    %317 = vmatpush1.xpose.msra.mxu0 %v286
    %318 = vmatprep.subr.mxu0 0.0
    %319 = vmatpush1.xpose.msra.mxu0 %v287
    %320 = vmatprep.subr.mxu0 0.0
    %321 = vmatpush1.xpose.msra.mxu0 0.0
    %322 = vmatprep.subr.mxu0 0.0
    %323 = vmatpush1.xpose.msra.mxu0 0.0
    %324 = vmatprep.subr.mxu0 0.0
    %325 = vmatpush1.xpose.msra.mxu0 0.0
    %326 = vmatprep.subr.mxu0 0.0
    %327 = vmatpush1.xpose.msra.mxu0 0.0
    %328 = vmatprep.subr.mxu0 0.0
    %329 = vmatpush1.xpose.msra.mxu0 0.0
    %330 = vmatprep.subr.mxu0 0.0
    %331 = vmatpush1.xpose.msra.mxu0 0.0
    %332 = vmatprep.subr.mxu0 0.0
    %333 = vmatpush1.xpose.msra.mxu0 0.0
    %334 = vmatprep.subr.mxu0 0.0
    %335 = vmatpush1.xpose.msra.mxu0 0.0
    %336 = vmatprep.subr.mxu0 0.0
    %337 = vmatpush1.xpose.msra.mxu0 0.0
    %338 = vmatprep.subr.mxu0 0.0
    %339 = vmatpush1.xpose.msra.mxu0 0.0
    %340 = vmatprep.subr.mxu0 0.0
    %341 = vmatpush1.xpose.msra.mxu0 0.0
    %342 = vmatprep.subr.mxu0 0.0
    %343 = vmatpush1.xpose.msra.mxu0 0.0
    %344 = vmatprep.subr.mxu0 0.0
    %345 = vmatpush1.xpose.msra.mxu0 0.0
    %346 = vmatprep.subr.mxu0 0.0
    %347 = vmatpush1.xpose.msra.mxu0 0.0
    %348 = vmatprep.subr.mxu0 0.0
    %349 = vmatpush1.xpose.msra.mxu0 0.0
    %350 = vmatprep.subr.mxu0 0.0
    %351 = vmatpush1.xpose.msra.mxu0 0.0
    %352 = vmatprep.mubr.f32.mxu0 0.0
    %353 = vmatmul.mubr.f32.gmra.mrb[0].mxu0 %v269
    %v354 = vpop.f32.mrb[0].mxu0
    %v355 = vadd.f32 0.0, %v354
    %v356 = vpop.f32.mrb[0].mxu0
    %357 = vdwg.mxu0
    %358 = vmatprep.subr.mxu0 0.0
    %359 = vmatpush1.xpose.msra.mxu0 %v272
    %360 = vmatprep.subr.mxu0 0.0
    %361 = vmatpush1.xpose.msra.mxu0 %v273
    %362 = vmatprep.subr.mxu0 0.0
    %363 = vmatpush1.xpose.msra.mxu0 %v274
    %364 = vmatprep.subr.mxu0 0.0
    %365 = vmatpush1.xpose.msra.mxu0 %v275
    %366 = vmatprep.subr.mxu0 0.0
    %367 = vmatpush1.xpose.msra.mxu0 %v276
    %368 = vmatprep.subr.mxu0 0.0
    %369 = vmatpush1.xpose.msra.mxu0 %v277
    %370 = vmatprep.subr.mxu0 0.0
    %371 = vmatpush1.xpose.msra.mxu0 %v278
    %372 = vmatprep.subr.mxu0 0.0
    %373 = vmatpush1.xpose.msra.mxu0 %v279
    %374 = vmatprep.subr.mxu0 0.0
    %375 = vmatpush1.xpose.msra.mxu0 %v280
    %376 = vmatprep.subr.mxu0 0.0
    %377 = vmatpush1.xpose.msra.mxu0 %v281
    %378 = vmatprep.subr.mxu0 0.0
    %379 = vmatpush1.xpose.msra.mxu0 %v282
    %380 = vmatprep.subr.mxu0 0.0
    %381 = vmatpush1.xpose.msra.mxu0 %v283
    %382 = vmatprep.subr.mxu0 0.0
    %383 = vmatpush1.xpose.msra.mxu0 %v284
    %384 = vmatprep.subr.mxu0 0.0
    %385 = vmatpush1.xpose.msra.mxu0 %v285
    %386 = vmatprep.subr.mxu0 0.0
    %387 = vmatpush1.xpose.msra.mxu0 %v286
    %388 = vmatprep.subr.mxu0 0.0
    %389 = vmatpush1.xpose.msra.mxu0 %v287
    %390 = vmatprep.subr.mxu0 0.0
    %391 = vmatpush1.xpose.msra.mxu0 0.0
    %392 = vmatprep.subr.mxu0 0.0
    %393 = vmatpush1.xpose.msra.mxu0 0.0
    %394 = vmatprep.subr.mxu0 0.0
    %395 = vmatpush1.xpose.msra.mxu0 0.0
    %396 = vmatprep.subr.mxu0 0.0
    %397 = vmatpush1.xpose.msra.mxu0 0.0
    %398 = vmatprep.subr.mxu0 0.0
    %399 = vmatpush1.xpose.msra.mxu0 0.0
    %400 = vmatprep.subr.mxu0 0.0
    %401 = vmatpush1.xpose.msra.mxu0 0.0
    %402 = vmatprep.subr.mxu0 0.0
    %403 = vmatpush1.xpose.msra.mxu0 0.0
    %404 = vmatprep.subr.mxu0 0.0
    %405 = vmatpush1.xpose.msra.mxu0 0.0
    %406 = vmatprep.subr.mxu0 0.0
    %407 = vmatpush1.xpose.msra.mxu0 0.0
    %408 = vmatprep.subr.mxu0 0.0
    %409 = vmatpush1.xpose.msra.mxu0 0.0
    %410 = vmatprep.subr.mxu0 0.0
    %411 = vmatpush1.xpose.msra.mxu0 0.0
    %412 = vmatprep.subr.mxu0 0.0
    %413 = vmatpush1.xpose.msra.mxu0 0.0
    %414 = vmatprep.subr.mxu0 0.0
    %415 = vmatpush1.xpose.msra.mxu0 0.0
    %416 = vmatprep.subr.mxu0 0.0
    %417 = vmatpush1.xpose.msra.mxu0 0.0
    %418 = vmatprep.subr.mxu0 0.0
    %419 = vmatpush1.xpose.msra.mxu0 0.0
    %420 = vmatprep.subr.mxu0 0.0
    %421 = vmatpush1.xpose.msra.mxu0 0.0
    %422 = vmatprep.mubr.f32.mxu0 0.0
    %423 = vmatmul.mubr.f32.gmra.mrb[0].mxu0 %v355
    %v424 = vpop.f32.mrb[0].mxu0
    %v425 = vadd.f32 0.0, %v424
    %v426 = vpop.f32.mrb[0].mxu0
    %427 = vdwg.mxu0
    %v428 = vmul.f32 %v425, 2.0
    %v429 = vsub.f32 %v428, %v269
    %v431 = vrot.slane %v269, 4
    %v434 = vrot.slane %v355, 4
    %v436 = vrot.slane %v429, 4
    %v437 = vrot.slane %v434, 4
    %v440 = vsel %vm108, %v269, %v434
    %v441 = vsel %vm108, %v431, %v437
    %v442 = vld [vmem:[%s3] sm:$0xff]
    %v443 = vld [vmem:[%s3 + $0x8] sm:$0xff]
    %v444 = vld [vmem:[%s3 + $0x10] sm:$0xff]
    %v445 = vld [vmem:[%s3 + $0x18] sm:$0xff]
    %v446 = vld [vmem:[%s4] sm:$0xff]
    %v447 = vld [vmem:[%s4 + $0x8] sm:$0xff]
    %v448 = vld [vmem:[%s4 + $0x10] sm:$0xff]
    %v449 = vld [vmem:[%s4 + $0x18] sm:$0xff]
    %451 = vset.pattern.permute.xlu0 0
    %452 = vperm.xlu0 %451, %v446
    %v453 = vpop.permute.xlu0 %452
    %456 = vset.pattern.permute.xlu0 0
    %457 = vperm.xlu0 %456, %v447
    %v458 = vpop.permute.xlu0 %457
    %461 = vset.pattern.permute.xlu0 0
    %462 = vperm.xlu0 %461, %v448
    %v463 = vpop.permute.xlu0 %462
    %466 = vset.pattern.permute.xlu0 0
    %467 = vperm.xlu0 %466, %v449
    %v468 = vpop.permute.xlu0 %467
    %vm470 = vcmask 97280
    %v472 = vsel %vm470, %v442, 0
    %v475 = vsel %vm470, %v443, 0
    %v478 = vsel %vm470, %v444, 0
    %v481 = vsel %vm470, %v445, 0
    %v483 = vsel %vm108, %v429, 0
    %v485 = vsel %vm108, %v436, 0
    %487 = vmatprep.subr.mxu0 %v441
    %488 = vmatpush1.msra.mxu0 %v440
    %489 = vmatprep.subr.mxu0 %v485
    %490 = vmatpush1.msra.mxu0 %v483
    %491 = vmatprep.subr.mxu0 0.0
    %492 = vmatpush1.msra.mxu0 0.0
    %493 = vmatprep.subr.mxu0 0.0
    %494 = vmatpush1.msra.mxu0 0.0
    %495 = vmatprep.subr.mxu0 0.0
    %496 = vmatpush1.msra.mxu0 0.0
    %497 = vmatprep.subr.mxu0 0.0
    %498 = vmatpush1.msra.mxu0 0.0
    %499 = vmatprep.subr.mxu0 0.0
    %500 = vmatpush1.msra.mxu0 0.0
    %501 = vmatprep.subr.mxu0 0.0
    %502 = vmatpush1.msra.mxu0 0.0
    %503 = vmatprep.subr.mxu0 0.0
    %504 = vmatpush1.msra.mxu0 0.0
    %505 = vmatprep.subr.mxu0 0.0
    %506 = vmatpush1.msra.mxu0 0.0
    %507 = vmatprep.subr.mxu0 0.0
    %508 = vmatpush1.msra.mxu0 0.0
    %509 = vmatprep.subr.mxu0 0.0
    %510 = vmatpush1.msra.mxu0 0.0
    %511 = vmatprep.subr.mxu0 0.0
    %512 = vmatpush1.msra.mxu0 0.0
    %513 = vmatprep.subr.mxu0 0.0
    %514 = vmatpush1.msra.mxu0 0.0
    %515 = vmatprep.subr.mxu0 0.0
    %516 = vmatpush1.msra.mxu0 0.0
    %517 = vmatprep.subr.mxu0 0.0
    %518 = vmatpush1.msra.mxu0 0.0
    %519 = vmatprep.subr.mxu0 0.0
    %520 = vmatpush1.msra.mxu0 0.0
    %521 = vmatprep.subr.mxu0 0.0
    %522 = vmatpush1.msra.mxu0 0.0
    %523 = vmatprep.subr.mxu0 0.0
    %524 = vmatpush1.msra.mxu0 0.0
    %525 = vmatprep.subr.mxu0 0.0
    %526 = vmatpush1.msra.mxu0 0.0
    %527 = vmatprep.subr.mxu0 0.0
    %528 = vmatpush1.msra.mxu0 0.0
    %529 = vmatprep.subr.mxu0 0.0
    %530 = vmatpush1.msra.mxu0 0.0
    %531 = vmatprep.subr.mxu0 0.0
    %532 = vmatpush1.msra.mxu0 0.0
    %533 = vmatprep.subr.mxu0 0.0
    %534 = vmatpush1.msra.mxu0 0.0
    %535 = vmatprep.subr.mxu0 0.0
    %536 = vmatpush1.msra.mxu0 0.0
    %537 = vmatprep.subr.mxu0 0.0
    %538 = vmatpush1.msra.mxu0 0.0
    %539 = vmatprep.subr.mxu0 0.0
    %540 = vmatpush1.msra.mxu0 0.0
    %541 = vmatprep.subr.mxu0 0.0
    %542 = vmatpush1.msra.mxu0 0.0
    %543 = vmatprep.subr.mxu0 0.0
    %544 = vmatpush1.msra.mxu0 0.0
    %545 = vmatprep.subr.mxu0 0.0
    %546 = vmatpush1.msra.mxu0 0.0
    %547 = vmatprep.subr.mxu0 0.0
    %548 = vmatpush1.msra.mxu0 0.0
    %549 = vmatprep.subr.mxu0 0.0
    %550 = vmatpush1.msra.mxu0 0.0
    %551 = vmatprep.mubr.f32.mxu0 0.0
    %552 = vmatmul.mubr.f32.gmra.mrb[0].mxu0 %v472
    %v553 = vpop.f32.mrb[0].mxu0
    %v554 = vadd.f32 %v453, %v553
    %v555 = vpop.f32.mrb[0].mxu0
    %v556 = vadd.f32 %v453, %v555
    %557 = vmatprep.mubr.f32.mxu0 0.0
    %558 = vmatmul.mubr.f32.gmra.mrb[0].mxu0 %v475
    %v559 = vpop.f32.mrb[0].mxu0
    %v560 = vadd.f32 %v458, %v559
    %v561 = vpop.f32.mrb[0].mxu0
    %v562 = vadd.f32 %v458, %v561
    %563 = vmatprep.mubr.f32.mxu0 0.0
    %564 = vmatmul.mubr.f32.gmra.mrb[0].mxu0 %v478
    %v565 = vpop.f32.mrb[0].mxu0
    %v566 = vadd.f32 %v463, %v565
    %v567 = vpop.f32.mrb[0].mxu0
    %v568 = vadd.f32 %v463, %v567
    %569 = vmatprep.mubr.f32.mxu0 0.0
    %570 = vmatmul.mubr.f32.gmra.mrb[0].mxu0 %v481
    %v571 = vpop.f32.mrb[0].mxu0
    %v572 = vadd.f32 %v468, %v571
    %v573 = vpop.f32.mrb[0].mxu0
    %v574 = vadd.f32 %v468, %v573
    %575 = vdwg.mxu0
    %v576 = vmax.f32 %v554, 0.0
    %v577 = vmax.f32 %v556, 0.0
    %v578 = vmax.f32 %v560, 0.0
    %v579 = vmax.f32 %v562, 0.0
    %v580 = vmax.f32 %v566, 0.0
    %v581 = vmax.f32 %v568, 0.0
    %v582 = vmax.f32 %v572, 0.0
    %v583 = vmax.f32 %v574, 0.0
    %v584 = vadd.s32 %v133, 128
    %v585 = vadd.s32 %v133, 136
    %v586 = vadd.s32 %v133, 144
    %v587 = vadd.s32 %v133, 152
    %v588 = vadd.s32 %v133, 160
    %v589 = vadd.s32 %v133, 168
    %v590 = vadd.s32 %v133, 176
    %v591 = vadd.s32 %v133, 184
    %v592 = vadd.s32 %v133, 192
    %v593 = vadd.s32 %v133, 200
    %v594 = vadd.s32 %v133, 208
    %v595 = vadd.s32 %v133, 216
    %v596 = vadd.s32 %v133, 224
    %v597 = vadd.s32 %v133, 232
    %v598 = vadd.s32 %v133, 240
    %v599 = vadd.s32 %v133, 248
    %v600 = vlaneseq
    %v601 = vand.u32 %v600, 127
    %602 = vrot.lane.b32.xlu0 %v576, 127
    %v603 = vpop.permute.xlu0 %602
    %604 = vrot.lane.b32.xlu0 %v578, 127
    %v605 = vpop.permute.xlu0 %604
    %606 = vrot.lane.b32.xlu0 %v580, 127
    %v607 = vpop.permute.xlu0 %606
    %608 = vrot.lane.b32.xlu0 %v582, 127
    %v609 = vpop.permute.xlu0 %608
    %610 = vrot.lane.b32.xlu0 %v577, 127
    %v611 = vpop.permute.xlu0 %610
    %612 = vrot.lane.b32.xlu0 %v579, 127
    %v613 = vpop.permute.xlu0 %612
    %614 = vrot.lane.b32.xlu0 %v581, 127
    %v615 = vpop.permute.xlu0 %614
    %616 = vrot.lane.b32.xlu0 %v583, 127
    %v617 = vpop.permute.xlu0 %616
    %vm618 = vcmp.lt.s32.totalorder %v601, 127
    %v619 = vsel %vm618, %v603, %v611
    %v620 = vsel %vm618, %v605, %v613
    %v621 = vsel %vm618, %v607, %v615
    %v622 = vsel %vm618, %v609, %v617
    %v623 = vsel %vm618, %v611, %v603
    %v624 = vsel %vm618, %v613, %v605
    %v625 = vsel %vm618, %v615, %v607
    %v626 = vsel %vm618, %v617, %v609
    %v627 = vmax.f32 %v576, %v619
    %v628 = vmax.f32 %v577, %v623
    %v629 = vmax.f32 %v578, %v620
    %v630 = vmax.f32 %v579, %v624
    %v631 = vmax.f32 %v580, %v621
    %v632 = vmax.f32 %v581, %v625
    %v633 = vmax.f32 %v582, %v622
    %v634 = vmax.f32 %v583, %v626
    %635 = vrot.lane.b32.xlu0 %v576, 126
    %v636 = vpop.permute.xlu0 %635
    %637 = vrot.lane.b32.xlu0 %v578, 126
    %v638 = vpop.permute.xlu0 %637
    %639 = vrot.lane.b32.xlu0 %v580, 126
    %v640 = vpop.permute.xlu0 %639
    %641 = vrot.lane.b32.xlu0 %v582, 126
    %v642 = vpop.permute.xlu0 %641
    %643 = vrot.lane.b32.xlu0 %v577, 126
    %v644 = vpop.permute.xlu0 %643
    %645 = vrot.lane.b32.xlu0 %v579, 126
    %v646 = vpop.permute.xlu0 %645
    %647 = vrot.lane.b32.xlu0 %v581, 126
    %v648 = vpop.permute.xlu0 %647
    %649 = vrot.lane.b32.xlu0 %v583, 126
    %v650 = vpop.permute.xlu0 %649
    %vm651 = vcmp.lt.s32.totalorder %v601, 126
    %v652 = vsel %vm651, %v636, %v644
    %v653 = vsel %vm651, %v638, %v646
    %v654 = vsel %vm651, %v640, %v648
    %v655 = vsel %vm651, %v642, %v650
    %v656 = vsel %vm651, %v644, %v636
    %v657 = vsel %vm651, %v646, %v638
    %v658 = vsel %vm651, %v648, %v640
    %v659 = vsel %vm651, %v650, %v642
    %v660 = vmax.f32 %v627, %v652
    %v661 = vmax.f32 %v628, %v656
    %v662 = vmax.f32 %v629, %v653
    %v663 = vmax.f32 %v630, %v657
    %v664 = vmax.f32 %v631, %v654
    %v665 = vmax.f32 %v632, %v658
    %v666 = vmax.f32 %v633, %v655
    %v667 = vmax.f32 %v634, %v659
    %668 = vrot.lane.b32.xlu0 %v576, 125
    %v669 = vpop.permute.xlu0 %668
    %670 = vrot.lane.b32.xlu0 %v578, 125
    %v671 = vpop.permute.xlu0 %670
    %672 = vrot.lane.b32.xlu0 %v580, 125
    %v673 = vpop.permute.xlu0 %672
    %674 = vrot.lane.b32.xlu0 %v582, 125
    %v675 = vpop.permute.xlu0 %674
    %676 = vrot.lane.b32.xlu0 %v577, 125
    %v677 = vpop.permute.xlu0 %676
    %678 = vrot.lane.b32.xlu0 %v579, 125
    %v679 = vpop.permute.xlu0 %678
    %680 = vrot.lane.b32.xlu0 %v581, 125
    %v681 = vpop.permute.xlu0 %680
    %682 = vrot.lane.b32.xlu0 %v583, 125
    %v683 = vpop.permute.xlu0 %682
    %vm684 = vcmp.lt.s32.totalorder %v601, 125
    %v685 = vsel %vm684, %v669, %v677
    %v686 = vsel %vm684, %v671, %v679
    %v687 = vsel %vm684, %v673, %v681
    %v688 = vsel %vm684, %v675, %v683
    %v689 = vsel %vm684, %v677, %v669
    %v690 = vsel %vm684, %v679, %v671
    %v691 = vsel %vm684, %v681, %v673
    %v692 = vsel %vm684, %v683, %v675
    %v693 = vmax.f32 %v660, %v685
    %v694 = vmax.f32 %v661, %v689
    %v695 = vmax.f32 %v662, %v686
    %v696 = vmax.f32 %v663, %v690
    %v697 = vmax.f32 %v664, %v687
    %v698 = vmax.f32 %v665, %v691
    %v699 = vmax.f32 %v666, %v688
    %v700 = vmax.f32 %v667, %v692
    %v701 = vmul.u32 %v601, 4
    %vm702 = vcmp.eq.s32.totalorder %v133, %v701
    %vm703 = vcmp.eq.s32.totalorder %v134, %v701
    %vm704 = vcmp.eq.s32.totalorder %v135, %v701
    %vm705 = vcmp.eq.s32.totalorder %v136, %v701
    %vm706 = vcmp.eq.s32.totalorder %v137, %v701
    %vm707 = vcmp.eq.s32.totalorder %v138, %v701
    %vm708 = vcmp.eq.s32.totalorder %v139, %v701
    %vm709 = vcmp.eq.s32.totalorder %v140, %v701
    %vm710 = vcmp.eq.s32.totalorder %v141, %v701
    %vm711 = vcmp.eq.s32.totalorder %v142, %v701
    %vm712 = vcmp.eq.s32.totalorder %v143, %v701
    %vm713 = vcmp.eq.s32.totalorder %v144, %v701
    %vm714 = vcmp.eq.s32.totalorder %v145, %v701
    %vm715 = vcmp.eq.s32.totalorder %v146, %v701
    %vm716 = vcmp.eq.s32.totalorder %v147, %v701
    %vm717 = vcmp.eq.s32.totalorder %v148, %v701
    %vm718 = vcmp.eq.s32.totalorder %v584, %v701
    %vm719 = vcmp.eq.s32.totalorder %v585, %v701
    %vm720 = vcmp.eq.s32.totalorder %v586, %v701
    %vm721 = vcmp.eq.s32.totalorder %v587, %v701
    %vm722 = vcmp.eq.s32.totalorder %v588, %v701
    %vm723 = vcmp.eq.s32.totalorder %v589, %v701
    %vm724 = vcmp.eq.s32.totalorder %v590, %v701
    %vm725 = vcmp.eq.s32.totalorder %v591, %v701
    %vm726 = vcmp.eq.s32.totalorder %v592, %v701
    %vm727 = vcmp.eq.s32.totalorder %v593, %v701
    %vm728 = vcmp.eq.s32.totalorder %v594, %v701
    %vm729 = vcmp.eq.s32.totalorder %v595, %v701
    %vm730 = vcmp.eq.s32.totalorder %v596, %v701
    %vm731 = vcmp.eq.s32.totalorder %v597, %v701
    %vm732 = vcmp.eq.s32.totalorder %v598, %v701
    %vm733 = vcmp.eq.s32.totalorder %v599, %v701
    %v734 = vsel %vm702, 1, 0
    %v735 = vsel %vm703, 1, 0
    %v736 = vsel %vm704, 1, 0
    %v737 = vsel %vm705, 1, 0
    %v738 = vsel %vm706, 1, 0
    %v739 = vsel %vm707, 1, 0
    %v740 = vsel %vm708, 1, 0
    %v741 = vsel %vm709, 1, 0
    %v742 = vsel %vm710, 1, 0
    %v743 = vsel %vm711, 1, 0
    %v744 = vsel %vm712, 1, 0
    %v745 = vsel %vm713, 1, 0
    %v746 = vsel %vm714, 1, 0
    %v747 = vsel %vm715, 1, 0
    %v748 = vsel %vm716, 1, 0
    %v749 = vsel %vm717, 1, 0
    %v750 = vsel %vm718, 1, 0
    %v751 = vsel %vm719, 1, 0
    %v752 = vsel %vm720, 1, 0
    %v753 = vsel %vm721, 1, 0
    %v754 = vsel %vm722, 1, 0
    %v755 = vsel %vm723, 1, 0
    %v756 = vsel %vm724, 1, 0
    %v757 = vsel %vm725, 1, 0
    %v758 = vsel %vm726, 1, 0
    %v759 = vsel %vm727, 1, 0
    %v760 = vsel %vm728, 1, 0
    %v761 = vsel %vm729, 1, 0
    %v762 = vsel %vm730, 1, 0
    %v763 = vsel %vm731, 1, 0
    %v764 = vsel %vm732, 1, 0
    %v765 = vsel %vm733, 1, 0
    %v766 = vcvt.s32.f32 %v734
    %v767 = vcvt.s32.f32 %v735
    %v768 = vcvt.s32.f32 %v736
    %v769 = vcvt.s32.f32 %v737
    %v770 = vcvt.s32.f32 %v738
    %v771 = vcvt.s32.f32 %v739
    %v772 = vcvt.s32.f32 %v740
    %v773 = vcvt.s32.f32 %v741
    %v774 = vcvt.s32.f32 %v742
    %v775 = vcvt.s32.f32 %v743
    %v776 = vcvt.s32.f32 %v744
    %v777 = vcvt.s32.f32 %v745
    %v778 = vcvt.s32.f32 %v746
    %v779 = vcvt.s32.f32 %v747
    %v780 = vcvt.s32.f32 %v748
    %v781 = vcvt.s32.f32 %v749
    %v782 = vcvt.s32.f32 %v750
    %v783 = vcvt.s32.f32 %v751
    %v784 = vcvt.s32.f32 %v752
    %v785 = vcvt.s32.f32 %v753
    %v786 = vcvt.s32.f32 %v754
    %v787 = vcvt.s32.f32 %v755
    %v788 = vcvt.s32.f32 %v756
    %v789 = vcvt.s32.f32 %v757
    %v790 = vcvt.s32.f32 %v758
    %v791 = vcvt.s32.f32 %v759
    %v792 = vcvt.s32.f32 %v760
    %v793 = vcvt.s32.f32 %v761
    %v794 = vcvt.s32.f32 %v762
    %v795 = vcvt.s32.f32 %v763
    %v796 = vcvt.s32.f32 %v764
    %v797 = vcvt.s32.f32 %v765
    %798 = vmatprep.subr.mxu0 0.0
    %799 = vmatpush1.msra.mxu0 %v766
    %800 = vmatprep.subr.mxu0 0.0
    %801 = vmatpush1.msra.mxu0 %v767
    %802 = vmatprep.subr.mxu0 0.0
    %803 = vmatpush1.msra.mxu0 %v768
    %804 = vmatprep.subr.mxu0 0.0
    %805 = vmatpush1.msra.mxu0 %v769
    %806 = vmatprep.subr.mxu0 0.0
    %807 = vmatpush1.msra.mxu0 %v770
    %808 = vmatprep.subr.mxu0 0.0
    %809 = vmatpush1.msra.mxu0 %v771
    %810 = vmatprep.subr.mxu0 0.0
    %811 = vmatpush1.msra.mxu0 %v772
    %812 = vmatprep.subr.mxu0 0.0
    %813 = vmatpush1.msra.mxu0 %v773
    %814 = vmatprep.subr.mxu0 0.0
    %815 = vmatpush1.msra.mxu0 %v774
    %816 = vmatprep.subr.mxu0 0.0
    %817 = vmatpush1.msra.mxu0 %v775
    %818 = vmatprep.subr.mxu0 0.0
    %819 = vmatpush1.msra.mxu0 %v776
    %820 = vmatprep.subr.mxu0 0.0
    %821 = vmatpush1.msra.mxu0 %v777
    %822 = vmatprep.subr.mxu0 0.0
    %823 = vmatpush1.msra.mxu0 %v778
    %824 = vmatprep.subr.mxu0 0.0
    %825 = vmatpush1.msra.mxu0 %v779
    %826 = vmatprep.subr.mxu0 0.0
    %827 = vmatpush1.msra.mxu0 %v780
    %828 = vmatprep.subr.mxu0 0.0
    %829 = vmatpush1.msra.mxu0 %v781
    %830 = vmatprep.subr.mxu0 0.0
    %831 = vmatpush1.msra.mxu0 %v782
    %832 = vmatprep.subr.mxu0 0.0
    %833 = vmatpush1.msra.mxu0 %v783
    %834 = vmatprep.subr.mxu0 0.0
    %835 = vmatpush1.msra.mxu0 %v784
    %836 = vmatprep.subr.mxu0 0.0
    %837 = vmatpush1.msra.mxu0 %v785
    %838 = vmatprep.subr.mxu0 0.0
    %839 = vmatpush1.msra.mxu0 %v786
    %840 = vmatprep.subr.mxu0 0.0
    %841 = vmatpush1.msra.mxu0 %v787
    %842 = vmatprep.subr.mxu0 0.0
    %843 = vmatpush1.msra.mxu0 %v788
    %844 = vmatprep.subr.mxu0 0.0
    %845 = vmatpush1.msra.mxu0 %v789
    %846 = vmatprep.subr.mxu0 0.0
    %847 = vmatpush1.msra.mxu0 %v790
    %848 = vmatprep.subr.mxu0 0.0
    %849 = vmatpush1.msra.mxu0 %v791
    %850 = vmatprep.subr.mxu0 0.0
    %851 = vmatpush1.msra.mxu0 %v792
    %852 = vmatprep.subr.mxu0 0.0
    %853 = vmatpush1.msra.mxu0 %v793
    %854 = vmatprep.subr.mxu0 0.0
    %855 = vmatpush1.msra.mxu0 %v794
    %856 = vmatprep.subr.mxu0 0.0
    %857 = vmatpush1.msra.mxu0 %v795
    %858 = vmatprep.subr.mxu0 0.0
    %859 = vmatpush1.msra.mxu0 %v796
    %860 = vmatprep.subr.mxu0 0.0
    %861 = vmatpush1.msra.mxu0 %v797
    %862 = vmatprep.mubr.f32.mxu0 %v694
    %863 = vmatmul.mubr.f32.gmra.mrb[0].mxu0 %v693
    %v864 = vpop.f32.mrb[0].mxu0
    %v865 = vadd.f32 0.0, %v864
    %v866 = vpop.f32.mrb[0].mxu0
    %867 = vmatprep.mubr.f32.mxu0 %v696
    %868 = vmatmul.mubr.f32.gmra.mrb[0].mxu0 %v695
    %v869 = vpop.f32.mrb[0].mxu0
    %v870 = vadd.f32 0.0, %v869
    %v871 = vpop.f32.mrb[0].mxu0
    %872 = vmatprep.mubr.f32.mxu0 %v698
    %873 = vmatmul.mubr.f32.gmra.mrb[0].mxu0 %v697
    %v874 = vpop.f32.mrb[0].mxu0
    %v875 = vadd.f32 0.0, %v874
    %v876 = vpop.f32.mrb[0].mxu0
    %877 = vmatprep.mubr.f32.mxu0 %v700
    %878 = vmatmul.mubr.f32.gmra.mrb[0].mxu0 %v699
    %v879 = vpop.f32.mrb[0].mxu0
    %v880 = vadd.f32 0.0, %v879
    %v881 = vpop.f32.mrb[0].mxu0
    %882 = vdwg.mxu0
    %v883 = vld [vmem:[%s5] sm:$0xff]
    %v884 = vld [vmem:[%s5 + $0x8] sm:$0xff]
    %v885 = vld [vmem:[%s5 + $0x10] sm:$0xff]
    %v886 = vld [vmem:[%s5 + $0x18] sm:$0xff]
    %v887 = vld [vmem:[%s5 + $0x20] sm:$0xff]
    %v888 = vld [vmem:[%s5 + $0x28] sm:$0xff]
    %v889 = vld [vmem:[%s5 + $0x30] sm:$0xff]
    %v890 = vld [vmem:[%s5 + $0x38] sm:$0xff]
    %vm891 = vcmask 523264
    %v893 = vsel %vm891, %v865, 0
    %v896 = vsel %vm891, %v870, 0
    %v899 = vsel %vm891, %v875, 0
    %v902 = vsel %vm891, %v880, 0
    %v905 = vsel %vm891, %v883, 0
    %v908 = vsel %vm891, %v884, 0
    %v911 = vsel %vm891, %v885, 0
    %v914 = vsel %vm891, %v886, 0
    %v917 = vsel %vm891, %v887, 0
    %v920 = vsel %vm891, %v888, 0
    %v923 = vsel %vm891, %v889, 0
    %v926 = vsel %vm891, %v890, 0
    %928 = vmatprep.subr.mxu0 0.0
    %929 = vmatpush1.xpose.msra.mxu0 %v905
    %930 = vmatprep.subr.mxu0 0.0
    %931 = vmatpush1.xpose.msra.mxu0 %v908
    %932 = vmatprep.subr.mxu0 0.0
    %933 = vmatpush1.xpose.msra.mxu0 %v911
    %934 = vmatprep.subr.mxu0 0.0
    %935 = vmatpush1.xpose.msra.mxu0 %v914
    %936 = vmatprep.subr.mxu0 0.0
    %937 = vmatpush1.xpose.msra.mxu0 %v917
    %938 = vmatprep.subr.mxu0 0.0
    %939 = vmatpush1.xpose.msra.mxu0 %v920
    %940 = vmatprep.subr.mxu0 0.0
    %941 = vmatpush1.xpose.msra.mxu0 %v923
    %942 = vmatprep.subr.mxu0 0.0
    %943 = vmatpush1.xpose.msra.mxu0 %v926
    %944 = vmatprep.subr.mxu0 0.0
    %945 = vmatpush1.xpose.msra.mxu0 0.0
    %946 = vmatprep.subr.mxu0 0.0
    %947 = vmatpush1.xpose.msra.mxu0 0.0
    %948 = vmatprep.subr.mxu0 0.0
    %949 = vmatpush1.xpose.msra.mxu0 0.0
    %950 = vmatprep.subr.mxu0 0.0
    %951 = vmatpush1.xpose.msra.mxu0 0.0
    %952 = vmatprep.subr.mxu0 0.0
    %953 = vmatpush1.xpose.msra.mxu0 0.0
    %954 = vmatprep.subr.mxu0 0.0
    %955 = vmatpush1.xpose.msra.mxu0 0.0
    %956 = vmatprep.subr.mxu0 0.0
    %957 = vmatpush1.xpose.msra.mxu0 0.0
    %958 = vmatprep.subr.mxu0 0.0
    %959 = vmatpush1.xpose.msra.mxu0 0.0
    %960 = vmatprep.subr.mxu0 0.0
    %961 = vmatpush1.xpose.msra.mxu0 0.0
    %962 = vmatprep.subr.mxu0 0.0
    %963 = vmatpush1.xpose.msra.mxu0 0.0
    %964 = vmatprep.subr.mxu0 0.0
    %965 = vmatpush1.xpose.msra.mxu0 0.0
    %966 = vmatprep.subr.mxu0 0.0
    %967 = vmatpush1.xpose.msra.mxu0 0.0
    %968 = vmatprep.subr.mxu0 0.0
    %969 = vmatpush1.xpose.msra.mxu0 0.0
    %970 = vmatprep.subr.mxu0 0.0
    %971 = vmatpush1.xpose.msra.mxu0 0.0
    %972 = vmatprep.subr.mxu0 0.0
    %973 = vmatpush1.xpose.msra.mxu0 0.0
    %974 = vmatprep.subr.mxu0 0.0
    %975 = vmatpush1.xpose.msra.mxu0 0.0
    %976 = vmatprep.subr.mxu0 0.0
    %977 = vmatpush1.xpose.msra.mxu0 0.0
    %978 = vmatprep.subr.mxu0 0.0
    %979 = vmatpush1.xpose.msra.mxu0 0.0
    %980 = vmatprep.subr.mxu0 0.0
    %981 = vmatpush1.xpose.msra.mxu0 0.0
    %982 = vmatprep.subr.mxu0 0.0
    %983 = vmatpush1.xpose.msra.mxu0 0.0
    %984 = vmatprep.subr.mxu0 0.0
    %985 = vmatpush1.xpose.msra.mxu0 0.0
    %986 = vmatprep.subr.mxu0 0.0
    %987 = vmatpush1.xpose.msra.mxu0 0.0
    %988 = vmatprep.subr.mxu0 0.0
    %989 = vmatpush1.xpose.msra.mxu0 0.0
    %990 = vmatprep.subr.mxu0 0.0
    %991 = vmatpush1.xpose.msra.mxu0 0.0
    %992 = vmatprep.mubr.f32.mxu0 0.0
    %993 = vmatmul.mubr.f32.gmra.mrb[0].mxu0 %v893
    %v994 = vpop.f32.mrb[0].mxu0
    %v995 = vadd.f32 0.0, %v994
    %v996 = vpop.f32.mrb[0].mxu0
    %997 = vmatprep.mubr.f32.mxu0 0.0
    %998 = vmatmul.mubr.f32.gmra.mrb[0].mxu0 %v896
    %v999 = vpop.f32.mrb[0].mxu0
    %v1000 = vadd.f32 0.0, %v999
    %v1001 = vpop.f32.mrb[0].mxu0
    %1002 = vmatprep.mubr.f32.mxu0 0.0
    %1003 = vmatmul.mubr.f32.gmra.mrb[0].mxu0 %v899
    %v1004 = vpop.f32.mrb[0].mxu0
    %v1005 = vadd.f32 0.0, %v1004
    %v1006 = vpop.f32.mrb[0].mxu0
    %1007 = vmatprep.mubr.f32.mxu0 0.0
    %1008 = vmatmul.mubr.f32.gmra.mrb[0].mxu0 %v902
    %v1009 = vpop.f32.mrb[0].mxu0
    %v1010 = vadd.f32 0.0, %v1009
    %v1011 = vpop.f32.mrb[0].mxu0
    %1012 = vdwg.mxu0
    %v1014 = vsel %vm891, %v995, 0
    %v1017 = vsel %vm891, %v1000, 0
    %v1020 = vsel %vm891, %v1005, 0
    %v1023 = vsel %vm891, %v1010, 0
    %1025 = vmatprep.subr.mxu0 0.0
    %1026 = vmatpush1.xpose.msra.mxu0 %v905
    %1027 = vmatprep.subr.mxu0 0.0
    %1028 = vmatpush1.xpose.msra.mxu0 %v908
    %1029 = vmatprep.subr.mxu0 0.0
    %1030 = vmatpush1.xpose.msra.mxu0 %v911
    %1031 = vmatprep.subr.mxu0 0.0
    %1032 = vmatpush1.xpose.msra.mxu0 %v914
    %1033 = vmatprep.subr.mxu0 0.0
    %1034 = vmatpush1.xpose.msra.mxu0 %v917
    %1035 = vmatprep.subr.mxu0 0.0
    %1036 = vmatpush1.xpose.msra.mxu0 %v920
    %1037 = vmatprep.subr.mxu0 0.0
    %1038 = vmatpush1.xpose.msra.mxu0 %v923
    %1039 = vmatprep.subr.mxu0 0.0
    %1040 = vmatpush1.xpose.msra.mxu0 %v926
    %1041 = vmatprep.subr.mxu0 0.0
    %1042 = vmatpush1.xpose.msra.mxu0 0.0
    %1043 = vmatprep.subr.mxu0 0.0
    %1044 = vmatpush1.xpose.msra.mxu0 0.0
    %1045 = vmatprep.subr.mxu0 0.0
    %1046 = vmatpush1.xpose.msra.mxu0 0.0
    %1047 = vmatprep.subr.mxu0 0.0
    %1048 = vmatpush1.xpose.msra.mxu0 0.0
    %1049 = vmatprep.subr.mxu0 0.0
    %1050 = vmatpush1.xpose.msra.mxu0 0.0
    %1051 = vmatprep.subr.mxu0 0.0
    %1052 = vmatpush1.xpose.msra.mxu0 0.0
    %1053 = vmatprep.subr.mxu0 0.0
    %1054 = vmatpush1.xpose.msra.mxu0 0.0
    %1055 = vmatprep.subr.mxu0 0.0
    %1056 = vmatpush1.xpose.msra.mxu0 0.0
    %1057 = vmatprep.subr.mxu0 0.0
    %1058 = vmatpush1.xpose.msra.mxu0 0.0
    %1059 = vmatprep.subr.mxu0 0.0
    %1060 = vmatpush1.xpose.msra.mxu0 0.0
    %1061 = vmatprep.subr.mxu0 0.0
    %1062 = vmatpush1.xpose.msra.mxu0 0.0
    %1063 = vmatprep.subr.mxu0 0.0
    %1064 = vmatpush1.xpose.msra.mxu0 0.0
    %1065 = vmatprep.subr.mxu0 0.0
    %1066 = vmatpush1.xpose.msra.mxu0 0.0
    %1067 = vmatprep.subr.mxu0 0.0
    %1068 = vmatpush1.xpose.msra.mxu0 0.0
    %1069 = vmatprep.subr.mxu0 0.0
    %1070 = vmatpush1.xpose.msra.mxu0 0.0
    %1071 = vmatprep.subr.mxu0 0.0
    %1072 = vmatpush1.xpose.msra.mxu0 0.0
    %1073 = vmatprep.subr.mxu0 0.0
    %1074 = vmatpush1.xpose.msra.mxu0 0.0
    %1075 = vmatprep.subr.mxu0 0.0
    %1076 = vmatpush1.xpose.msra.mxu0 0.0
    %1077 = vmatprep.subr.mxu0 0.0
    %1078 = vmatpush1.xpose.msra.mxu0 0.0
    %1079 = vmatprep.subr.mxu0 0.0
    %1080 = vmatpush1.xpose.msra.mxu0 0.0
    %1081 = vmatprep.subr.mxu0 0.0
    %1082 = vmatpush1.xpose.msra.mxu0 0.0
    %1083 = vmatprep.subr.mxu0 0.0
    %1084 = vmatpush1.xpose.msra.mxu0 0.0
    %1085 = vmatprep.subr.mxu0 0.0
    %1086 = vmatpush1.xpose.msra.mxu0 0.0
    %1087 = vmatprep.subr.mxu0 0.0
    %1088 = vmatpush1.xpose.msra.mxu0 0.0
    %1089 = vmatprep.mubr.f32.mxu0 0.0
    %1090 = vmatmul.mubr.f32.gmra.mrb[0].mxu0 %v1014
    %v1091 = vpop.f32.mrb[0].mxu0
    %v1092 = vadd.f32 0.0, %v1091
    %v1093 = vpop.f32.mrb[0].mxu0
    %1094 = vmatprep.mubr.f32.mxu0 0.0
    %1095 = vmatmul.mubr.f32.gmra.mrb[0].mxu0 %v1017
    %v1096 = vpop.f32.mrb[0].mxu0
    %v1097 = vadd.f32 0.0, %v1096
    %v1098 = vpop.f32.mrb[0].mxu0
    %1099 = vmatprep.mubr.f32.mxu0 0.0
    %1100 = vmatmul.mubr.f32.gmra.mrb[0].mxu0 %v1020
    %v1101 = vpop.f32.mrb[0].mxu0
    %v1102 = vadd.f32 0.0, %v1101
    %v1103 = vpop.f32.mrb[0].mxu0
    %1104 = vmatprep.mubr.f32.mxu0 0.0
    %1105 = vmatmul.mubr.f32.gmra.mrb[0].mxu0 %v1023
    %v1106 = vpop.f32.mrb[0].mxu0
    %v1107 = vadd.f32 0.0, %v1106
    %v1108 = vpop.f32.mrb[0].mxu0
    %1109 = vdwg.mxu0
    %v1110 = vmul.f32 %v1092, 2.0
    %v1111 = vmul.f32 %v1097, 2.0
    %v1112 = vmul.f32 %v1102, 2.0
    %v1113 = vmul.f32 %v1107, 2.0
    %v1114 = vsub.f32 %v1110, %v865
    %v1115 = vsub.f32 %v1111, %v870
    %v1116 = vsub.f32 %v1112, %v875
    %v1117 = vsub.f32 %v1113, %v880
    %v1118 = vld [vmem:[%s6] sm:$0xff]
    %v1119 = vld [vmem:[%s6 + $0x8] sm:$0xff]
    %v1120 = vld [vmem:[%s6 + $0x10] sm:$0xff]
    %v1121 = vld [vmem:[%s6 + $0x18] sm:$0xff]
    %v1122 = vld [vmem:[%s6 + $0x20] sm:$0xff]
    %v1123 = vld [vmem:[%s6 + $0x28] sm:$0xff]
    %v1124 = vld [vmem:[%s6 + $0x30] sm:$0xff]
    %v1125 = vld [vmem:[%s6 + $0x38] sm:$0xff]
    %v1126 = vld [vmem:[%s7] sm:$0xff]
    %v1127 = vld [vmem:[%s7 + $0x8] sm:$0xff]
    %v1128 = vld [vmem:[%s7 + $0x10] sm:$0xff]
    %v1129 = vld [vmem:[%s7 + $0x18] sm:$0xff]
    %v1130 = vld [vmem:[%s7 + $0x20] sm:$0xff]
    %v1131 = vld [vmem:[%s7 + $0x28] sm:$0xff]
    %v1132 = vld [vmem:[%s7 + $0x30] sm:$0xff]
    %v1133 = vld [vmem:[%s7 + $0x38] sm:$0xff]
    %1135 = vset.pattern.permute.xlu0 0
    %1136 = vperm.xlu0 %1135, %v1126
    %v1137 = vpop.permute.xlu0 %1136
    %1140 = vset.pattern.permute.xlu0 0
    %1141 = vperm.xlu0 %1140, %v1127
    %v1142 = vpop.permute.xlu0 %1141
    %1145 = vset.pattern.permute.xlu0 0
    %1146 = vperm.xlu0 %1145, %v1128
    %v1147 = vpop.permute.xlu0 %1146
    %1150 = vset.pattern.permute.xlu0 0
    %1151 = vperm.xlu0 %1150, %v1129
    %v1152 = vpop.permute.xlu0 %1151
    %1155 = vset.pattern.permute.xlu0 0
    %1156 = vperm.xlu0 %1155, %v1130
    %v1157 = vpop.permute.xlu0 %1156
    %1160 = vset.pattern.permute.xlu0 0
    %1161 = vperm.xlu0 %1160, %v1131
    %v1162 = vpop.permute.xlu0 %1161
    %1165 = vset.pattern.permute.xlu0 0
    %1166 = vperm.xlu0 %1165, %v1132
    %v1167 = vpop.permute.xlu0 %1166
    %1170 = vset.pattern.permute.xlu0 0
    %1171 = vperm.xlu0 %1170, %v1133
    %v1172 = vpop.permute.xlu0 %1171
    %vm1174 = vcmask 785408
    %v1176 = vsel %vm1174, %v1118, 0
    %v1179 = vsel %vm1174, %v1119, 0
    %v1182 = vsel %vm1174, %v1120, 0
    %v1185 = vsel %vm1174, %v1121, 0
    %v1188 = vsel %vm1174, %v1122, 0
    %v1191 = vsel %vm1174, %v1123, 0
    %v1194 = vsel %vm1174, %v1124, 0
    %v1197 = vsel %vm1174, %v1125, 0
    %1199 = vmatprep.subr.mxu0 0.0
    %1200 = vmatpush1.msra.mxu0 %v865
    %1201 = vmatprep.subr.mxu0 0.0
    %1202 = vmatpush1.msra.mxu0 %v870
    %1203 = vmatprep.subr.mxu0 0.0
    %1204 = vmatpush1.msra.mxu0 %v875
    %1205 = vmatprep.subr.mxu0 0.0
    %1206 = vmatpush1.msra.mxu0 %v880
    %1207 = vmatprep.subr.mxu0 0.0
    %1208 = vmatpush1.msra.mxu0 %v995
    %1209 = vmatprep.subr.mxu0 0.0
    %1210 = vmatpush1.msra.mxu0 %v1000
    %1211 = vmatprep.subr.mxu0 0.0
    %1212 = vmatpush1.msra.mxu0 %v1005
    %1213 = vmatprep.subr.mxu0 0.0
    %1214 = vmatpush1.msra.mxu0 %v1010
    %1215 = vmatprep.subr.mxu0 0.0
    %1216 = vmatpush1.msra.mxu0 %v1114
    %1217 = vmatprep.subr.mxu0 0.0
    %1218 = vmatpush1.msra.mxu0 %v1115
    %1219 = vmatprep.subr.mxu0 0.0
    %1220 = vmatpush1.msra.mxu0 %v1116
    %1221 = vmatprep.subr.mxu0 0.0
    %1222 = vmatpush1.msra.mxu0 %v1117
    %1223 = vmatprep.subr.mxu0 0.0
    %1224 = vmatpush1.msra.mxu0 0.0
    %1225 = vmatprep.subr.mxu0 0.0
    %1226 = vmatpush1.msra.mxu0 0.0
    %1227 = vmatprep.subr.mxu0 0.0
    %1228 = vmatpush1.msra.mxu0 0.0
    %1229 = vmatprep.subr.mxu0 0.0
    %1230 = vmatpush1.msra.mxu0 0.0
    %1231 = vmatprep.subr.mxu0 0.0
    %1232 = vmatpush1.msra.mxu0 0.0
    %1233 = vmatprep.subr.mxu0 0.0
    %1234 = vmatpush1.msra.mxu0 0.0
    %1235 = vmatprep.subr.mxu0 0.0
    %1236 = vmatpush1.msra.mxu0 0.0
    %1237 = vmatprep.subr.mxu0 0.0
    %1238 = vmatpush1.msra.mxu0 0.0
    %1239 = vmatprep.subr.mxu0 0.0
    %1240 = vmatpush1.msra.mxu0 0.0
    %1241 = vmatprep.subr.mxu0 0.0
    %1242 = vmatpush1.msra.mxu0 0.0
    %1243 = vmatprep.subr.mxu0 0.0
    %1244 = vmatpush1.msra.mxu0 0.0
    %1245 = vmatprep.subr.mxu0 0.0
    %1246 = vmatpush1.msra.mxu0 0.0
    %1247 = vmatprep.subr.mxu0 0.0
    %1248 = vmatpush1.msra.mxu0 0.0
    %1249 = vmatprep.subr.mxu0 0.0
    %1250 = vmatpush1.msra.mxu0 0.0
    %1251 = vmatprep.subr.mxu0 0.0
    %1252 = vmatpush1.msra.mxu0 0.0
    %1253 = vmatprep.subr.mxu0 0.0
    %1254 = vmatpush1.msra.mxu0 0.0
    %1255 = vmatprep.subr.mxu0 0.0
    %1256 = vmatpush1.msra.mxu0 0.0
    %1257 = vmatprep.subr.mxu0 0.0
    %1258 = vmatpush1.msra.mxu0 0.0
    %1259 = vmatprep.subr.mxu0 0.0
    %1260 = vmatpush1.msra.mxu0 0.0
    %1261 = vmatprep.subr.mxu0 0.0
    %1262 = vmatpush1.msra.mxu0 0.0
    %1263 = vmatprep.mubr.f32.mxu0 0.0
    %1264 = vmatmul.mubr.f32.gmra.mrb[0].mxu0 %v1176
    %v1265 = vpop.f32.mrb[0].mxu0
    %v1266 = vadd.f32 %v1137, %v1265
    %v1267 = vpop.f32.mrb[0].mxu0
    %1268 = vmatprep.mubr.f32.mxu0 0.0
    %1269 = vmatmul.mubr.f32.gmra.mrb[0].mxu0 %v1179
    %v1270 = vpop.f32.mrb[0].mxu0
    %v1271 = vadd.f32 %v1142, %v1270
    %v1272 = vpop.f32.mrb[0].mxu0
    %1273 = vmatprep.mubr.f32.mxu0 0.0
    %1274 = vmatmul.mubr.f32.gmra.mrb[0].mxu0 %v1182
    %v1275 = vpop.f32.mrb[0].mxu0
    %v1276 = vadd.f32 %v1147, %v1275
    %v1277 = vpop.f32.mrb[0].mxu0
    %1278 = vmatprep.mubr.f32.mxu0 0.0
    %1279 = vmatmul.mubr.f32.gmra.mrb[0].mxu0 %v1185
    %v1280 = vpop.f32.mrb[0].mxu0
    %v1281 = vadd.f32 %v1152, %v1280
    %v1282 = vpop.f32.mrb[0].mxu0
    %1283 = vmatprep.mubr.f32.mxu0 0.0
    %1284 = vmatmul.mubr.f32.gmra.mrb[0].mxu0 %v1188
    %v1285 = vpop.f32.mrb[0].mxu0
    %v1286 = vadd.f32 %v1157, %v1285
    %v1287 = vpop.f32.mrb[0].mxu0
    %1288 = vmatprep.mubr.f32.mxu0 0.0
    %1289 = vmatmul.mubr.f32.gmra.mrb[0].mxu0 %v1191
    %v1290 = vpop.f32.mrb[0].mxu0
    %v1291 = vadd.f32 %v1162, %v1290
    %v1292 = vpop.f32.mrb[0].mxu0
    %1293 = vmatprep.mubr.f32.mxu0 0.0
    %1294 = vmatmul.mubr.f32.gmra.mrb[0].mxu0 %v1194
    %v1295 = vpop.f32.mrb[0].mxu0
    %v1296 = vadd.f32 %v1167, %v1295
    %v1297 = vpop.f32.mrb[0].mxu0
    %1298 = vmatprep.mubr.f32.mxu0 0.0
    %1299 = vmatmul.mubr.f32.gmra.mrb[0].mxu0 %v1197
    %v1300 = vpop.f32.mrb[0].mxu0
    %v1301 = vadd.f32 %v1172, %v1300
    %v1302 = vpop.f32.mrb[0].mxu0
    %1303 = vdwg.mxu0
    %v1304 = vmax.f32 %v1266, 0.0
    %v1305 = vmax.f32 %v1271, 0.0
    %v1306 = vmax.f32 %v1276, 0.0
    %v1307 = vmax.f32 %v1281, 0.0
    %v1308 = vmax.f32 %v1286, 0.0
    %v1309 = vmax.f32 %v1291, 0.0
    %v1310 = vmax.f32 %v1296, 0.0
    %v1311 = vmax.f32 %v1301, 0.0
    %v1313 = vsel %vm891, %v1304, 0
    %v1316 = vsel %vm891, %v1305, 0
    %v1319 = vsel %vm891, %v1306, 0
    %v1322 = vsel %vm891, %v1307, 0
    %v1325 = vsel %vm891, %v1308, 0
    %v1328 = vsel %vm891, %v1309, 0
    %v1331 = vsel %vm891, %v1310, 0
    %v1334 = vsel %vm891, %v1311, 0
    %1336 = vmatprep.subr.mxu0 0.0
    %1337 = vmatpush1.msra.mxu0 %v766
    %1338 = vmatprep.subr.mxu0 0.0
    %1339 = vmatpush1.msra.mxu0 %v767
    %1340 = vmatprep.subr.mxu0 0.0
    %1341 = vmatpush1.msra.mxu0 %v768
    %1342 = vmatprep.subr.mxu0 0.0
    %1343 = vmatpush1.msra.mxu0 %v769
    %1344 = vmatprep.subr.mxu0 0.0
    %1345 = vmatpush1.msra.mxu0 %v770
    %1346 = vmatprep.subr.mxu0 0.0
    %1347 = vmatpush1.msra.mxu0 %v771
    %1348 = vmatprep.subr.mxu0 0.0
    %1349 = vmatpush1.msra.mxu0 %v772
    %1350 = vmatprep.subr.mxu0 0.0
    %1351 = vmatpush1.msra.mxu0 %v773
    %1352 = vmatprep.subr.mxu0 0.0
    %1353 = vmatpush1.msra.mxu0 0.0
    %1354 = vmatprep.subr.mxu0 0.0
    %1355 = vmatpush1.msra.mxu0 0.0
    %1356 = vmatprep.subr.mxu0 0.0
    %1357 = vmatpush1.msra.mxu0 0.0
    %1358 = vmatprep.subr.mxu0 0.0
    %1359 = vmatpush1.msra.mxu0 0.0
    %1360 = vmatprep.subr.mxu0 0.0
    %1361 = vmatpush1.msra.mxu0 0.0
    %1362 = vmatprep.subr.mxu0 0.0
    %1363 = vmatpush1.msra.mxu0 0.0
    %1364 = vmatprep.subr.mxu0 0.0
    %1365 = vmatpush1.msra.mxu0 0.0
    %1366 = vmatprep.subr.mxu0 0.0
    %1367 = vmatpush1.msra.mxu0 0.0
    %1368 = vmatprep.subr.mxu0 0.0
    %1369 = vmatpush1.msra.mxu0 0.0
    %1370 = vmatprep.subr.mxu0 0.0
    %1371 = vmatpush1.msra.mxu0 0.0
    %1372 = vmatprep.subr.mxu0 0.0
    %1373 = vmatpush1.msra.mxu0 0.0
    %1374 = vmatprep.subr.mxu0 0.0
    %1375 = vmatpush1.msra.mxu0 0.0
    %1376 = vmatprep.subr.mxu0 0.0
    %1377 = vmatpush1.msra.mxu0 0.0
    %1378 = vmatprep.subr.mxu0 0.0
    %1379 = vmatpush1.msra.mxu0 0.0
    %1380 = vmatprep.subr.mxu0 0.0
    %1381 = vmatpush1.msra.mxu0 0.0
    %1382 = vmatprep.subr.mxu0 0.0
    %1383 = vmatpush1.msra.mxu0 0.0
    %1384 = vmatprep.subr.mxu0 0.0
    %1385 = vmatpush1.msra.mxu0 0.0
    %1386 = vmatprep.subr.mxu0 0.0
    %1387 = vmatpush1.msra.mxu0 0.0
    %1388 = vmatprep.subr.mxu0 0.0
    %1389 = vmatpush1.msra.mxu0 0.0
    %1390 = vmatprep.subr.mxu0 0.0
    %1391 = vmatpush1.msra.mxu0 0.0
    %1392 = vmatprep.subr.mxu0 0.0
    %1393 = vmatpush1.msra.mxu0 0.0
    %1394 = vmatprep.subr.mxu0 0.0
    %1395 = vmatpush1.msra.mxu0 0.0
    %1396 = vmatprep.subr.mxu0 0.0
    %1397 = vmatpush1.msra.mxu0 0.0
    %1398 = vmatprep.subr.mxu0 0.0
    %1399 = vmatpush1.msra.mxu0 0.0
    %1400 = vmatprep.mubr.f32.mxu0 0.0
    %1401 = vmatmul.mubr.f32.gmra.mrb[0].mxu0 %v1313
    %v1402 = vpop.f32.mrb[0].mxu0
    %v1403 = vadd.f32 0.0, %v1402
    %v1404 = vpop.f32.mrb[0].mxu0
    %1405 = vmatprep.mubr.f32.mxu0 0.0
    %1406 = vmatmul.mubr.f32.gmra.mrb[0].mxu0 %v1316
    %v1407 = vpop.f32.mrb[0].mxu0
    %v1408 = vadd.f32 0.0, %v1407
    %v1409 = vpop.f32.mrb[0].mxu0
    %1410 = vmatprep.mubr.f32.mxu0 0.0
    %1411 = vmatmul.mubr.f32.gmra.mrb[0].mxu0 %v1319
    %v1412 = vpop.f32.mrb[0].mxu0
    %v1413 = vadd.f32 0.0, %v1412
    %v1414 = vpop.f32.mrb[0].mxu0
    %1415 = vmatprep.mubr.f32.mxu0 0.0
    %1416 = vmatmul.mubr.f32.gmra.mrb[0].mxu0 %v1322
    %v1417 = vpop.f32.mrb[0].mxu0
    %v1418 = vadd.f32 0.0, %v1417
    %v1419 = vpop.f32.mrb[0].mxu0
    %1420 = vmatprep.mubr.f32.mxu0 0.0
    %1421 = vmatmul.mubr.f32.gmra.mrb[0].mxu0 %v1325
    %v1422 = vpop.f32.mrb[0].mxu0
    %v1423 = vadd.f32 0.0, %v1422
    %v1424 = vpop.f32.mrb[0].mxu0
    %1425 = vmatprep.mubr.f32.mxu0 0.0
    %1426 = vmatmul.mubr.f32.gmra.mrb[0].mxu0 %v1328
    %v1427 = vpop.f32.mrb[0].mxu0
    %v1428 = vadd.f32 0.0, %v1427
    %v1429 = vpop.f32.mrb[0].mxu0
    %1430 = vmatprep.mubr.f32.mxu0 0.0
    %1431 = vmatmul.mubr.f32.gmra.mrb[0].mxu0 %v1331
    %v1432 = vpop.f32.mrb[0].mxu0
    %v1433 = vadd.f32 0.0, %v1432
    %v1434 = vpop.f32.mrb[0].mxu0
    %1435 = vmatprep.mubr.f32.mxu0 0.0
    %1436 = vmatmul.mubr.f32.gmra.mrb[0].mxu0 %v1334
    %v1437 = vpop.f32.mrb[0].mxu0
    %v1438 = vadd.f32 0.0, %v1437
    %v1439 = vpop.f32.mrb[0].mxu0
    %1440 = vdwg.mxu0
    %v1441 = vadd.s32 %v701, 1
    %vm1442 = vcmp.eq.s32.totalorder %v133, %v1441
    %vm1443 = vcmp.eq.s32.totalorder %v134, %v1441
    %vm1444 = vcmp.eq.s32.totalorder %v135, %v1441
    %vm1445 = vcmp.eq.s32.totalorder %v136, %v1441
    %vm1446 = vcmp.eq.s32.totalorder %v137, %v1441
    %vm1447 = vcmp.eq.s32.totalorder %v138, %v1441
    %vm1448 = vcmp.eq.s32.totalorder %v139, %v1441
    %vm1449 = vcmp.eq.s32.totalorder %v140, %v1441
    %v1450 = vsel %vm1442, 1, 0
    %v1451 = vsel %vm1443, 1, 0
    %v1452 = vsel %vm1444, 1, 0
    %v1453 = vsel %vm1445, 1, 0
    %v1454 = vsel %vm1446, 1, 0
    %v1455 = vsel %vm1447, 1, 0
    %v1456 = vsel %vm1448, 1, 0
    %v1457 = vsel %vm1449, 1, 0
    %v1458 = vcvt.s32.f32 %v1450
    %v1459 = vcvt.s32.f32 %v1451
    %v1460 = vcvt.s32.f32 %v1452
    %v1461 = vcvt.s32.f32 %v1453
    %v1462 = vcvt.s32.f32 %v1454
    %v1463 = vcvt.s32.f32 %v1455
    %v1464 = vcvt.s32.f32 %v1456
    %v1465 = vcvt.s32.f32 %v1457
    %1466 = vmatprep.subr.mxu0 0.0
    %1467 = vmatpush1.msra.mxu0 %v1458
    %1468 = vmatprep.subr.mxu0 0.0
    %1469 = vmatpush1.msra.mxu0 %v1459
    %1470 = vmatprep.subr.mxu0 0.0
    %1471 = vmatpush1.msra.mxu0 %v1460
    %1472 = vmatprep.subr.mxu0 0.0
    %1473 = vmatpush1.msra.mxu0 %v1461
    %1474 = vmatprep.subr.mxu0 0.0
    %1475 = vmatpush1.msra.mxu0 %v1462
    %1476 = vmatprep.subr.mxu0 0.0
    %1477 = vmatpush1.msra.mxu0 %v1463
    %1478 = vmatprep.subr.mxu0 0.0
    %1479 = vmatpush1.msra.mxu0 %v1464
    %1480 = vmatprep.subr.mxu0 0.0
    %1481 = vmatpush1.msra.mxu0 %v1465
    %1482 = vmatprep.subr.mxu0 0.0
    %1483 = vmatpush1.msra.mxu0 0.0
    %1484 = vmatprep.subr.mxu0 0.0
    %1485 = vmatpush1.msra.mxu0 0.0
    %1486 = vmatprep.subr.mxu0 0.0
    %1487 = vmatpush1.msra.mxu0 0.0
    %1488 = vmatprep.subr.mxu0 0.0
    %1489 = vmatpush1.msra.mxu0 0.0
    %1490 = vmatprep.subr.mxu0 0.0
    %1491 = vmatpush1.msra.mxu0 0.0
    %1492 = vmatprep.subr.mxu0 0.0
    %1493 = vmatpush1.msra.mxu0 0.0
    %1494 = vmatprep.subr.mxu0 0.0
    %1495 = vmatpush1.msra.mxu0 0.0
    %1496 = vmatprep.subr.mxu0 0.0
    %1497 = vmatpush1.msra.mxu0 0.0
    %1498 = vmatprep.subr.mxu0 0.0
    %1499 = vmatpush1.msra.mxu0 0.0
    %1500 = vmatprep.subr.mxu0 0.0
    %1501 = vmatpush1.msra.mxu0 0.0
    %1502 = vmatprep.subr.mxu0 0.0
    %1503 = vmatpush1.msra.mxu0 0.0
    %1504 = vmatprep.subr.mxu0 0.0
    %1505 = vmatpush1.msra.mxu0 0.0
    %1506 = vmatprep.subr.mxu0 0.0
    %1507 = vmatpush1.msra.mxu0 0.0
    %1508 = vmatprep.subr.mxu0 0.0
    %1509 = vmatpush1.msra.mxu0 0.0
    %1510 = vmatprep.subr.mxu0 0.0
    %1511 = vmatpush1.msra.mxu0 0.0
    %1512 = vmatprep.subr.mxu0 0.0
    %1513 = vmatpush1.msra.mxu0 0.0
    %1514 = vmatprep.subr.mxu0 0.0
    %1515 = vmatpush1.msra.mxu0 0.0
    %1516 = vmatprep.subr.mxu0 0.0
    %1517 = vmatpush1.msra.mxu0 0.0
    %1518 = vmatprep.subr.mxu0 0.0
    %1519 = vmatpush1.msra.mxu0 0.0
    %1520 = vmatprep.subr.mxu0 0.0
    %1521 = vmatpush1.msra.mxu0 0.0
    %1522 = vmatprep.subr.mxu0 0.0
    %1523 = vmatpush1.msra.mxu0 0.0
    %1524 = vmatprep.subr.mxu0 0.0
    %1525 = vmatpush1.msra.mxu0 0.0
    %1526 = vmatprep.subr.mxu0 0.0
    %1527 = vmatpush1.msra.mxu0 0.0
    %1528 = vmatprep.subr.mxu0 0.0
    %1529 = vmatpush1.msra.mxu0 0.0
    %1530 = vmatprep.mubr.f32.mxu0 0.0
    %1531 = vmatmul.mubr.f32.gmra.mrb[0].mxu0 %v1313
    %v1532 = vpop.f32.mrb[0].mxu0
    %v1533 = vadd.f32 0.0, %v1532
    %v1534 = vpop.f32.mrb[0].mxu0
    %1535 = vmatprep.mubr.f32.mxu0 0.0
    %1536 = vmatmul.mubr.f32.gmra.mrb[0].mxu0 %v1316
    %v1537 = vpop.f32.mrb[0].mxu0
    %v1538 = vadd.f32 0.0, %v1537
    %v1539 = vpop.f32.mrb[0].mxu0
    %1540 = vmatprep.mubr.f32.mxu0 0.0
    %1541 = vmatmul.mubr.f32.gmra.mrb[0].mxu0 %v1319
    %v1542 = vpop.f32.mrb[0].mxu0
    %v1543 = vadd.f32 0.0, %v1542
    %v1544 = vpop.f32.mrb[0].mxu0
    %1545 = vmatprep.mubr.f32.mxu0 0.0
    %1546 = vmatmul.mubr.f32.gmra.mrb[0].mxu0 %v1322
    %v1547 = vpop.f32.mrb[0].mxu0
    %v1548 = vadd.f32 0.0, %v1547
    %v1549 = vpop.f32.mrb[0].mxu0
    %1550 = vmatprep.mubr.f32.mxu0 0.0
    %1551 = vmatmul.mubr.f32.gmra.mrb[0].mxu0 %v1325
    %v1552 = vpop.f32.mrb[0].mxu0
    %v1553 = vadd.f32 0.0, %v1552
    %v1554 = vpop.f32.mrb[0].mxu0
    %1555 = vmatprep.mubr.f32.mxu0 0.0
    %1556 = vmatmul.mubr.f32.gmra.mrb[0].mxu0 %v1328
    %v1557 = vpop.f32.mrb[0].mxu0
    %v1558 = vadd.f32 0.0, %v1557
    %v1559 = vpop.f32.mrb[0].mxu0
    %1560 = vmatprep.mubr.f32.mxu0 0.0
    %1561 = vmatmul.mubr.f32.gmra.mrb[0].mxu0 %v1331
    %v1562 = vpop.f32.mrb[0].mxu0
    %v1563 = vadd.f32 0.0, %v1562
    %v1564 = vpop.f32.mrb[0].mxu0
    %1565 = vmatprep.mubr.f32.mxu0 0.0
    %1566 = vmatmul.mubr.f32.gmra.mrb[0].mxu0 %v1334
    %v1567 = vpop.f32.mrb[0].mxu0
    %v1568 = vadd.f32 0.0, %v1567
    %v1569 = vpop.f32.mrb[0].mxu0
    %1570 = vdwg.mxu0
    %v1571 = vmax.f32 %v1403, %v1533
    %v1572 = vmax.f32 %v1408, %v1538
    %v1573 = vmax.f32 %v1413, %v1543
    %v1574 = vmax.f32 %v1418, %v1548
    %v1575 = vmax.f32 %v1423, %v1553
    %v1576 = vmax.f32 %v1428, %v1558
    %v1577 = vmax.f32 %v1433, %v1563
    %v1578 = vmax.f32 %v1438, %v1568
    %v1579 = vadd.s32 %v701, 2
    %vm1580 = vcmp.eq.s32.totalorder %v133, %v1579
    %vm1581 = vcmp.eq.s32.totalorder %v134, %v1579
    %vm1582 = vcmp.eq.s32.totalorder %v135, %v1579
    %vm1583 = vcmp.eq.s32.totalorder %v136, %v1579
    %vm1584 = vcmp.eq.s32.totalorder %v137, %v1579
    %vm1585 = vcmp.eq.s32.totalorder %v138, %v1579
    %vm1586 = vcmp.eq.s32.totalorder %v139, %v1579
    %vm1587 = vcmp.eq.s32.totalorder %v140, %v1579
    %v1588 = vsel %vm1580, 1, 0
    %v1589 = vsel %vm1581, 1, 0
    %v1590 = vsel %vm1582, 1, 0
    %v1591 = vsel %vm1583, 1, 0
    %v1592 = vsel %vm1584, 1, 0
    %v1593 = vsel %vm1585, 1, 0
    %v1594 = vsel %vm1586, 1, 0
    %v1595 = vsel %vm1587, 1, 0
    %v1596 = vcvt.s32.f32 %v1588
    %v1597 = vcvt.s32.f32 %v1589
    %v1598 = vcvt.s32.f32 %v1590
    %v1599 = vcvt.s32.f32 %v1591
    %v1600 = vcvt.s32.f32 %v1592
    %v1601 = vcvt.s32.f32 %v1593
    %v1602 = vcvt.s32.f32 %v1594
    %v1603 = vcvt.s32.f32 %v1595
    %1604 = vmatprep.subr.mxu0 0.0
    %1605 = vmatpush1.msra.mxu0 %v1596
    %1606 = vmatprep.subr.mxu0 0.0
    %1607 = vmatpush1.msra.mxu0 %v1597
    %1608 = vmatprep.subr.mxu0 0.0
    %1609 = vmatpush1.msra.mxu0 %v1598
    %1610 = vmatprep.subr.mxu0 0.0
    %1611 = vmatpush1.msra.mxu0 %v1599
    %1612 = vmatprep.subr.mxu0 0.0
    %1613 = vmatpush1.msra.mxu0 %v1600
    %1614 = vmatprep.subr.mxu0 0.0
    %1615 = vmatpush1.msra.mxu0 %v1601
    %1616 = vmatprep.subr.mxu0 0.0
    %1617 = vmatpush1.msra.mxu0 %v1602
    %1618 = vmatprep.subr.mxu0 0.0
    %1619 = vmatpush1.msra.mxu0 %v1603
    %1620 = vmatprep.subr.mxu0 0.0
    %1621 = vmatpush1.msra.mxu0 0.0
    %1622 = vmatprep.subr.mxu0 0.0
    %1623 = vmatpush1.msra.mxu0 0.0
    %1624 = vmatprep.subr.mxu0 0.0
    %1625 = vmatpush1.msra.mxu0 0.0
    %1626 = vmatprep.subr.mxu0 0.0
    %1627 = vmatpush1.msra.mxu0 0.0
    %1628 = vmatprep.subr.mxu0 0.0
    %1629 = vmatpush1.msra.mxu0 0.0
    %1630 = vmatprep.subr.mxu0 0.0
    %1631 = vmatpush1.msra.mxu0 0.0
    %1632 = vmatprep.subr.mxu0 0.0
    %1633 = vmatpush1.msra.mxu0 0.0
    %1634 = vmatprep.subr.mxu0 0.0
    %1635 = vmatpush1.msra.mxu0 0.0
    %1636 = vmatprep.subr.mxu0 0.0
    %1637 = vmatpush1.msra.mxu0 0.0
    %1638 = vmatprep.subr.mxu0 0.0
    %1639 = vmatpush1.msra.mxu0 0.0
    %1640 = vmatprep.subr.mxu0 0.0
    %1641 = vmatpush1.msra.mxu0 0.0
    %1642 = vmatprep.subr.mxu0 0.0
    %1643 = vmatpush1.msra.mxu0 0.0
    %1644 = vmatprep.subr.mxu0 0.0
    %1645 = vmatpush1.msra.mxu0 0.0
    %1646 = vmatprep.subr.mxu0 0.0
    %1647 = vmatpush1.msra.mxu0 0.0
    %1648 = vmatprep.subr.mxu0 0.0
    %1649 = vmatpush1.msra.mxu0 0.0
    %1650 = vmatprep.subr.mxu0 0.0
    %1651 = vmatpush1.msra.mxu0 0.0
    %1652 = vmatprep.subr.mxu0 0.0
    %1653 = vmatpush1.msra.mxu0 0.0
    %1654 = vmatprep.subr.mxu0 0.0
    %1655 = vmatpush1.msra.mxu0 0.0
    %1656 = vmatprep.subr.mxu0 0.0
    %1657 = vmatpush1.msra.mxu0 0.0
    %1658 = vmatprep.subr.mxu0 0.0
    %1659 = vmatpush1.msra.mxu0 0.0
    %1660 = vmatprep.subr.mxu0 0.0
    %1661 = vmatpush1.msra.mxu0 0.0
    %1662 = vmatprep.subr.mxu0 0.0
    %1663 = vmatpush1.msra.mxu0 0.0
    %1664 = vmatprep.subr.mxu0 0.0
    %1665 = vmatpush1.msra.mxu0 0.0
    %1666 = vmatprep.subr.mxu0 0.0
    %1667 = vmatpush1.msra.mxu0 0.0
    %1668 = vmatprep.mubr.f32.mxu0 0.0
    %1669 = vmatmul.mubr.f32.gmra.mrb[0].mxu0 %v1313
    %v1670 = vpop.f32.mrb[0].mxu0
    %v1671 = vadd.f32 0.0, %v1670
    %v1672 = vpop.f32.mrb[0].mxu0
    %1673 = vmatprep.mubr.f32.mxu0 0.0
    %1674 = vmatmul.mubr.f32.gmra.mrb[0].mxu0 %v1316
    %v1675 = vpop.f32.mrb[0].mxu0
    %v1676 = vadd.f32 0.0, %v1675
    %v1677 = vpop.f32.mrb[0].mxu0
    %1678 = vmatprep.mubr.f32.mxu0 0.0
    %1679 = vmatmul.mubr.f32.gmra.mrb[0].mxu0 %v1319
    %v1680 = vpop.f32.mrb[0].mxu0
    %v1681 = vadd.f32 0.0, %v1680
    %v1682 = vpop.f32.mrb[0].mxu0
    %1683 = vmatprep.mubr.f32.mxu0 0.0
    %1684 = vmatmul.mubr.f32.gmra.mrb[0].mxu0 %v1322
    %v1685 = vpop.f32.mrb[0].mxu0
    %v1686 = vadd.f32 0.0, %v1685
    %v1687 = vpop.f32.mrb[0].mxu0
    %1688 = vmatprep.mubr.f32.mxu0 0.0
    %1689 = vmatmul.mubr.f32.gmra.mrb[0].mxu0 %v1325
    %v1690 = vpop.f32.mrb[0].mxu0
    %v1691 = vadd.f32 0.0, %v1690
    %v1692 = vpop.f32.mrb[0].mxu0
    %1693 = vmatprep.mubr.f32.mxu0 0.0
    %1694 = vmatmul.mubr.f32.gmra.mrb[0].mxu0 %v1328
    %v1695 = vpop.f32.mrb[0].mxu0
    %v1696 = vadd.f32 0.0, %v1695
    %v1697 = vpop.f32.mrb[0].mxu0
    %1698 = vmatprep.mubr.f32.mxu0 0.0
    %1699 = vmatmul.mubr.f32.gmra.mrb[0].mxu0 %v1331
    %v1700 = vpop.f32.mrb[0].mxu0
    %v1701 = vadd.f32 0.0, %v1700
    %v1702 = vpop.f32.mrb[0].mxu0
    %1703 = vmatprep.mubr.f32.mxu0 0.0
    %1704 = vmatmul.mubr.f32.gmra.mrb[0].mxu0 %v1334
    %v1705 = vpop.f32.mrb[0].mxu0
    %v1706 = vadd.f32 0.0, %v1705
    %v1707 = vpop.f32.mrb[0].mxu0
    %1708 = vdwg.mxu0
    %v1709 = vmax.f32 %v1571, %v1671
    %v1710 = vmax.f32 %v1572, %v1676
    %v1711 = vmax.f32 %v1573, %v1681
    %v1712 = vmax.f32 %v1574, %v1686
    %v1713 = vmax.f32 %v1575, %v1691
    %v1714 = vmax.f32 %v1576, %v1696
    %v1715 = vmax.f32 %v1577, %v1701
    %v1716 = vmax.f32 %v1578, %v1706
    %v1717 = vadd.s32 %v701, 3
    %vm1718 = vcmp.eq.s32.totalorder %v133, %v1717
    %vm1719 = vcmp.eq.s32.totalorder %v134, %v1717
    %vm1720 = vcmp.eq.s32.totalorder %v135, %v1717
    %vm1721 = vcmp.eq.s32.totalorder %v136, %v1717
    %vm1722 = vcmp.eq.s32.totalorder %v137, %v1717
    %vm1723 = vcmp.eq.s32.totalorder %v138, %v1717
    %vm1724 = vcmp.eq.s32.totalorder %v139, %v1717
    %vm1725 = vcmp.eq.s32.totalorder %v140, %v1717
    %v1726 = vsel %vm1718, 1, 0
    %v1727 = vsel %vm1719, 1, 0
    %v1728 = vsel %vm1720, 1, 0
    %v1729 = vsel %vm1721, 1, 0
    %v1730 = vsel %vm1722, 1, 0
    %v1731 = vsel %vm1723, 1, 0
    %v1732 = vsel %vm1724, 1, 0
    %v1733 = vsel %vm1725, 1, 0
    %v1734 = vcvt.s32.f32 %v1726
    %v1735 = vcvt.s32.f32 %v1727
    %v1736 = vcvt.s32.f32 %v1728
    %v1737 = vcvt.s32.f32 %v1729
    %v1738 = vcvt.s32.f32 %v1730
    %v1739 = vcvt.s32.f32 %v1731
    %v1740 = vcvt.s32.f32 %v1732
    %v1741 = vcvt.s32.f32 %v1733
    %1742 = vmatprep.subr.mxu0 0.0
    %1743 = vmatpush1.msra.mxu0 %v1734
    %1744 = vmatprep.subr.mxu0 0.0
    %1745 = vmatpush1.msra.mxu0 %v1735
    %1746 = vmatprep.subr.mxu0 0.0
    %1747 = vmatpush1.msra.mxu0 %v1736
    %1748 = vmatprep.subr.mxu0 0.0
    %1749 = vmatpush1.msra.mxu0 %v1737
    %1750 = vmatprep.subr.mxu0 0.0
    %1751 = vmatpush1.msra.mxu0 %v1738
    %1752 = vmatprep.subr.mxu0 0.0
    %1753 = vmatpush1.msra.mxu0 %v1739
    %1754 = vmatprep.subr.mxu0 0.0
    %1755 = vmatpush1.msra.mxu0 %v1740
    %1756 = vmatprep.subr.mxu0 0.0
    %1757 = vmatpush1.msra.mxu0 %v1741
    %1758 = vmatprep.subr.mxu0 0.0
    %1759 = vmatpush1.msra.mxu0 0.0
    %1760 = vmatprep.subr.mxu0 0.0
    %1761 = vmatpush1.msra.mxu0 0.0
    %1762 = vmatprep.subr.mxu0 0.0
    %1763 = vmatpush1.msra.mxu0 0.0
    %1764 = vmatprep.subr.mxu0 0.0
    %1765 = vmatpush1.msra.mxu0 0.0
    %1766 = vmatprep.subr.mxu0 0.0
    %1767 = vmatpush1.msra.mxu0 0.0
    %1768 = vmatprep.subr.mxu0 0.0
    %1769 = vmatpush1.msra.mxu0 0.0
    %1770 = vmatprep.subr.mxu0 0.0
    %1771 = vmatpush1.msra.mxu0 0.0
    %1772 = vmatprep.subr.mxu0 0.0
    %1773 = vmatpush1.msra.mxu0 0.0
    %1774 = vmatprep.subr.mxu0 0.0
    %1775 = vmatpush1.msra.mxu0 0.0
    %1776 = vmatprep.subr.mxu0 0.0
    %1777 = vmatpush1.msra.mxu0 0.0
    %1778 = vmatprep.subr.mxu0 0.0
    %1779 = vmatpush1.msra.mxu0 0.0
    %1780 = vmatprep.subr.mxu0 0.0
    %1781 = vmatpush1.msra.mxu0 0.0
    %1782 = vmatprep.subr.mxu0 0.0
    %1783 = vmatpush1.msra.mxu0 0.0
    %1784 = vmatprep.subr.mxu0 0.0
    %1785 = vmatpush1.msra.mxu0 0.0
    %1786 = vmatprep.subr.mxu0 0.0
    %1787 = vmatpush1.msra.mxu0 0.0
    %1788 = vmatprep.subr.mxu0 0.0
    %1789 = vmatpush1.msra.mxu0 0.0
    %1790 = vmatprep.subr.mxu0 0.0
    %1791 = vmatpush1.msra.mxu0 0.0
    %1792 = vmatprep.subr.mxu0 0.0
    %1793 = vmatpush1.msra.mxu0 0.0
    %1794 = vmatprep.subr.mxu0 0.0
    %1795 = vmatpush1.msra.mxu0 0.0
    %1796 = vmatprep.subr.mxu0 0.0
    %1797 = vmatpush1.msra.mxu0 0.0
    %1798 = vmatprep.subr.mxu0 0.0
    %1799 = vmatpush1.msra.mxu0 0.0
    %1800 = vmatprep.subr.mxu0 0.0
    %1801 = vmatpush1.msra.mxu0 0.0
    %1802 = vmatprep.subr.mxu0 0.0
    %1803 = vmatpush1.msra.mxu0 0.0
    %1804 = vmatprep.subr.mxu0 0.0
    %1805 = vmatpush1.msra.mxu0 0.0
    %1806 = vmatprep.mubr.f32.mxu0 0.0
    %1807 = vmatmul.mubr.f32.gmra.mrb[0].mxu0 %v1313
    %v1808 = vpop.f32.mrb[0].mxu0
    %v1809 = vadd.f32 0.0, %v1808
    %v1810 = vpop.f32.mrb[0].mxu0
    %1811 = vmatprep.mubr.f32.mxu0 0.0
    %1812 = vmatmul.mubr.f32.gmra.mrb[0].mxu0 %v1316
    %v1813 = vpop.f32.mrb[0].mxu0
    %v1814 = vadd.f32 0.0, %v1813
    %v1815 = vpop.f32.mrb[0].mxu0
    %1816 = vmatprep.mubr.f32.mxu0 0.0
    %1817 = vmatmul.mubr.f32.gmra.mrb[0].mxu0 %v1319
    %v1818 = vpop.f32.mrb[0].mxu0
    %v1819 = vadd.f32 0.0, %v1818
    %v1820 = vpop.f32.mrb[0].mxu0
    %1821 = vmatprep.mubr.f32.mxu0 0.0
    %1822 = vmatmul.mubr.f32.gmra.mrb[0].mxu0 %v1322
    %v1823 = vpop.f32.mrb[0].mxu0
    %v1824 = vadd.f32 0.0, %v1823
    %v1825 = vpop.f32.mrb[0].mxu0
    %1826 = vmatprep.mubr.f32.mxu0 0.0
    %1827 = vmatmul.mubr.f32.gmra.mrb[0].mxu0 %v1325
    %v1828 = vpop.f32.mrb[0].mxu0
    %v1829 = vadd.f32 0.0, %v1828
    %v1830 = vpop.f32.mrb[0].mxu0
    %1831 = vmatprep.mubr.f32.mxu0 0.0
    %1832 = vmatmul.mubr.f32.gmra.mrb[0].mxu0 %v1328
    %v1833 = vpop.f32.mrb[0].mxu0
    %v1834 = vadd.f32 0.0, %v1833
    %v1835 = vpop.f32.mrb[0].mxu0
    %1836 = vmatprep.mubr.f32.mxu0 0.0
    %1837 = vmatmul.mubr.f32.gmra.mrb[0].mxu0 %v1331
    %v1838 = vpop.f32.mrb[0].mxu0
    %v1839 = vadd.f32 0.0, %v1838
    %v1840 = vpop.f32.mrb[0].mxu0
    %1841 = vmatprep.mubr.f32.mxu0 0.0
    %1842 = vmatmul.mubr.f32.gmra.mrb[0].mxu0 %v1334
    %v1843 = vpop.f32.mrb[0].mxu0
    %v1844 = vadd.f32 0.0, %v1843
    %v1845 = vpop.f32.mrb[0].mxu0
    %1846 = vdwg.mxu0
    %v1847 = vmax.f32 %v1709, %v1809
    %v1848 = vmax.f32 %v1710, %v1814
    %v1849 = vmax.f32 %v1711, %v1819
    %v1850 = vmax.f32 %v1712, %v1824
    %v1851 = vmax.f32 %v1713, %v1829
    %v1852 = vmax.f32 %v1714, %v1834
    %v1853 = vmax.f32 %v1715, %v1839
    %v1854 = vmax.f32 %v1716, %v1844
    %vm1855 = vcmp.eq.s32.totalorder %v133, %v601
    %vm1856 = vcmp.eq.s32.totalorder %v134, %v601
    %v1857 = vsel %vm1855, 1, 0
    %v1858 = vsel %vm1856, 1, 0
    %v1859 = vcvt.s32.f32 %v1857
    %v1860 = vcvt.s32.f32 %v1858
    %vm1861 = vcmask 130048
    %v1863 = vsel %vm1861, %v1859, 0
    %v1866 = vsel %vm1861, %v1860, 0
    %v1869 = vsel %vm1861, %v1847, 0
    %v1872 = vsel %vm1861, %v1848, 0
    %v1875 = vsel %vm1861, %v1849, 0
    %v1878 = vsel %vm1861, %v1850, 0
    %v1881 = vsel %vm1861, %v1851, 0
    %v1884 = vsel %vm1861, %v1852, 0
    %v1887 = vsel %vm1861, %v1853, 0
    %v1890 = vsel %vm1861, %v1854, 0
    %1892 = vmatprep.subr.mxu0 0.0
    %1893 = vmatpush1.xpose.msra.mxu0 %v1869
    %1894 = vmatprep.subr.mxu0 0.0
    %1895 = vmatpush1.xpose.msra.mxu0 %v1872
    %1896 = vmatprep.subr.mxu0 0.0
    %1897 = vmatpush1.xpose.msra.mxu0 %v1875
    %1898 = vmatprep.subr.mxu0 0.0
    %1899 = vmatpush1.xpose.msra.mxu0 %v1878
    %1900 = vmatprep.subr.mxu0 0.0
    %1901 = vmatpush1.xpose.msra.mxu0 %v1881
    %1902 = vmatprep.subr.mxu0 0.0
    %1903 = vmatpush1.xpose.msra.mxu0 %v1884
    %1904 = vmatprep.subr.mxu0 0.0
    %1905 = vmatpush1.xpose.msra.mxu0 %v1887
    %1906 = vmatprep.subr.mxu0 0.0
    %1907 = vmatpush1.xpose.msra.mxu0 %v1890
    %1908 = vmatprep.subr.mxu0 0.0
    %1909 = vmatpush1.xpose.msra.mxu0 0.0
    %1910 = vmatprep.subr.mxu0 0.0
    %1911 = vmatpush1.xpose.msra.mxu0 0.0
    %1912 = vmatprep.subr.mxu0 0.0
    %1913 = vmatpush1.xpose.msra.mxu0 0.0
    %1914 = vmatprep.subr.mxu0 0.0
    %1915 = vmatpush1.xpose.msra.mxu0 0.0
    %1916 = vmatprep.subr.mxu0 0.0
    %1917 = vmatpush1.xpose.msra.mxu0 0.0
    %1918 = vmatprep.subr.mxu0 0.0
    %1919 = vmatpush1.xpose.msra.mxu0 0.0
    %1920 = vmatprep.subr.mxu0 0.0
    %1921 = vmatpush1.xpose.msra.mxu0 0.0
    %1922 = vmatprep.subr.mxu0 0.0
    %1923 = vmatpush1.xpose.msra.mxu0 0.0
    %1924 = vmatprep.subr.mxu0 0.0
    %1925 = vmatpush1.xpose.msra.mxu0 0.0
    %1926 = vmatprep.subr.mxu0 0.0
    %1927 = vmatpush1.xpose.msra.mxu0 0.0
    %1928 = vmatprep.subr.mxu0 0.0
    %1929 = vmatpush1.xpose.msra.mxu0 0.0
    %1930 = vmatprep.subr.mxu0 0.0
    %1931 = vmatpush1.xpose.msra.mxu0 0.0
    %1932 = vmatprep.subr.mxu0 0.0
    %1933 = vmatpush1.xpose.msra.mxu0 0.0
    %1934 = vmatprep.subr.mxu0 0.0
    %1935 = vmatpush1.xpose.msra.mxu0 0.0
    %1936 = vmatprep.subr.mxu0 0.0
    %1937 = vmatpush1.xpose.msra.mxu0 0.0
    %1938 = vmatprep.subr.mxu0 0.0
    %1939 = vmatpush1.xpose.msra.mxu0 0.0
    %1940 = vmatprep.subr.mxu0 0.0
    %1941 = vmatpush1.xpose.msra.mxu0 0.0
    %1942 = vmatprep.subr.mxu0 0.0
    %1943 = vmatpush1.xpose.msra.mxu0 0.0
    %1944 = vmatprep.subr.mxu0 0.0
    %1945 = vmatpush1.xpose.msra.mxu0 0.0
    %1946 = vmatprep.subr.mxu0 0.0
    %1947 = vmatpush1.xpose.msra.mxu0 0.0
    %1948 = vmatprep.subr.mxu0 0.0
    %1949 = vmatpush1.xpose.msra.mxu0 0.0
    %1950 = vmatprep.subr.mxu0 0.0
    %1951 = vmatpush1.xpose.msra.mxu0 0.0
    %1952 = vmatprep.subr.mxu0 0.0
    %1953 = vmatpush1.xpose.msra.mxu0 0.0
    %1954 = vmatprep.subr.mxu0 0.0
    %1955 = vmatpush1.xpose.msra.mxu0 0.0
    %1956 = vmatprep.mubr.f32.mxu0 0.0
    %1957 = vmatmul.mubr.f32.gmra.mrb[0].mxu0 %v1863
    %v1958 = vpop.f32.mrb[0].mxu0
    %v1959 = vadd.f32 0.0, %v1958
    %v1960 = vpop.f32.mrb[0].mxu0
    %1961 = vmatprep.mubr.f32.mxu0 0.0
    %1962 = vmatmul.mubr.f32.gmra.mrb[0].mxu0 %v1866
    %v1963 = vpop.f32.mrb[0].mxu0
    %v1964 = vadd.f32 0.0, %v1963
    %v1965 = vpop.f32.mrb[0].mxu0
    %1966 = vdwg.mxu0
    %v1967 = vld [vmem:[#allocation7] sm:$0xff]
    %v1968 = vld [vmem:[#allocation7 + $0x8] sm:$0xff]
    %v1969 = vld [vmem:[#allocation7 + $0x10] sm:$0xff]
    %v1970 = vld [vmem:[#allocation7 + $0x18] sm:$0xff]
    %v1971 = vld [vmem:[#allocation7 + $0x20] sm:$0xff]
    %v1972 = vld [vmem:[#allocation7 + $0x28] sm:$0xff]
    %v1973 = vld [vmem:[#allocation7 + $0x30] sm:$0xff]
    %v1974 = vld [vmem:[#allocation7 + $0x38] sm:$0xff]
    %v1976 = vsel %vm891, %v1959, 0
    %v1979 = vsel %vm891, %v1964, 0
    %1981 = vmatprep.subr.mxu0 0.0
    %1982 = vmatpush1.msra.mxu0 %v1967
    %1983 = vmatprep.subr.mxu0 0.0
    %1984 = vmatpush1.msra.mxu0 %v1968
    %1985 = vmatprep.subr.mxu0 0.0
    %1986 = vmatpush1.msra.mxu0 %v1969
    %1987 = vmatprep.subr.mxu0 0.0
    %1988 = vmatpush1.msra.mxu0 %v1970
    %1989 = vmatprep.subr.mxu0 0.0
    %1990 = vmatpush1.msra.mxu0 %v1971
    %1991 = vmatprep.subr.mxu0 0.0
    %1992 = vmatpush1.msra.mxu0 %v1972
    %1993 = vmatprep.subr.mxu0 0.0
    %1994 = vmatpush1.msra.mxu0 %v1973
    %1995 = vmatprep.subr.mxu0 0.0
    %1996 = vmatpush1.msra.mxu0 %v1974
    %1997 = vmatprep.subr.mxu0 0.0
    %1998 = vmatpush1.msra.mxu0 0.0
    %1999 = vmatprep.subr.mxu0 0.0
    %2000 = vmatpush1.msra.mxu0 0.0
    %2001 = vmatprep.subr.mxu0 0.0
    %2002 = vmatpush1.msra.mxu0 0.0
    %2003 = vmatprep.subr.mxu0 0.0
    %2004 = vmatpush1.msra.mxu0 0.0
    %2005 = vmatprep.subr.mxu0 0.0
    %2006 = vmatpush1.msra.mxu0 0.0
    %2007 = vmatprep.subr.mxu0 0.0
    %2008 = vmatpush1.msra.mxu0 0.0
    %2009 = vmatprep.subr.mxu0 0.0
    %2010 = vmatpush1.msra.mxu0 0.0
    %2011 = vmatprep.subr.mxu0 0.0
    %2012 = vmatpush1.msra.mxu0 0.0
    %2013 = vmatprep.subr.mxu0 0.0
    %2014 = vmatpush1.msra.mxu0 0.0
    %2015 = vmatprep.subr.mxu0 0.0
    %2016 = vmatpush1.msra.mxu0 0.0
    %2017 = vmatprep.subr.mxu0 0.0
    %2018 = vmatpush1.msra.mxu0 0.0
    %2019 = vmatprep.subr.mxu0 0.0
    %2020 = vmatpush1.msra.mxu0 0.0
    %2021 = vmatprep.subr.mxu0 0.0
    %2022 = vmatpush1.msra.mxu0 0.0
    %2023 = vmatprep.subr.mxu0 0.0
    %2024 = vmatpush1.msra.mxu0 0.0
    %2025 = vmatprep.subr.mxu0 0.0
    %2026 = vmatpush1.msra.mxu0 0.0
    %2027 = vmatprep.subr.mxu0 0.0
    %2028 = vmatpush1.msra.mxu0 0.0
    %2029 = vmatprep.subr.mxu0 0.0
    %2030 = vmatpush1.msra.mxu0 0.0
    %2031 = vmatprep.subr.mxu0 0.0
    %2032 = vmatpush1.msra.mxu0 0.0
    %2033 = vmatprep.subr.mxu0 0.0
    %2034 = vmatpush1.msra.mxu0 0.0
    %2035 = vmatprep.subr.mxu0 0.0
    %2036 = vmatpush1.msra.mxu0 0.0
    %2037 = vmatprep.subr.mxu0 0.0
    %2038 = vmatpush1.msra.mxu0 0.0
    %2039 = vmatprep.subr.mxu0 0.0
    %2040 = vmatpush1.msra.mxu0 0.0
    %2041 = vmatprep.subr.mxu0 0.0
    %2042 = vmatpush1.msra.mxu0 0.0
    %2043 = vmatprep.subr.mxu0 0.0
    %2044 = vmatpush1.msra.mxu0 0.0
    %2045 = vmatprep.mubr.f32.mxu0 0.0
    %2046 = vmatmul.mubr.f32.gmra.mrb[0].mxu0 %v1976
    %v2047 = vpop.f32.mrb[0].mxu0
    %v2048 = vadd.f32 0.0, %v2047
    %v2049 = vpop.f32.mrb[0].mxu0
    %2050 = vmatprep.mubr.f32.mxu0 0.0
    %2051 = vmatmul.mubr.f32.gmra.mrb[0].mxu0 %v1979
    %v2052 = vpop.f32.mrb[0].mxu0
    %v2053 = vadd.f32 0.0, %v2052
    %v2054 = vpop.f32.mrb[0].mxu0
    %2055 = vdwg.mxu0
    %v2056 = vld [vmem:[%s9] sm:$0xff]
    %v2057 = vld [vmem:[%s9 + $0x8] sm:$0xff]
    %v2058 = vmul.f32 %v2048, %v2056
    %v2059 = vmul.f32 %v2053, %v2057
    %v2060 = vld [vmem:[%s10] sm:$0x3]
    %v2062 = vsel %vm1861, %v2060, 0
    %2064 = vmatprep.subr.mxu0 0.0
    %2065 = vmatpush1.msra.mxu0 %v2058
    %2066 = vmatprep.subr.mxu0 0.0
    %2067 = vmatpush1.msra.mxu0 %v2059
    %2068 = vmatprep.subr.mxu0 0.0
    %2069 = vmatpush1.msra.mxu0 0.0
    %2070 = vmatprep.subr.mxu0 0.0
    %2071 = vmatpush1.msra.mxu0 0.0
    %2072 = vmatprep.subr.mxu0 0.0
    %2073 = vmatpush1.msra.mxu0 0.0
    %2074 = vmatprep.subr.mxu0 0.0
    %2075 = vmatpush1.msra.mxu0 0.0
    %2076 = vmatprep.subr.mxu0 0.0
    %2077 = vmatpush1.msra.mxu0 0.0
    %2078 = vmatprep.subr.mxu0 0.0
    %2079 = vmatpush1.msra.mxu0 0.0
    %2080 = vmatprep.subr.mxu0 0.0
    %2081 = vmatpush1.msra.mxu0 0.0
    %2082 = vmatprep.subr.mxu0 0.0
    %2083 = vmatpush1.msra.mxu0 0.0
    %2084 = vmatprep.subr.mxu0 0.0
    %2085 = vmatpush1.msra.mxu0 0.0
    %2086 = vmatprep.subr.mxu0 0.0
    %2087 = vmatpush1.msra.mxu0 0.0
    %2088 = vmatprep.subr.mxu0 0.0
    %2089 = vmatpush1.msra.mxu0 0.0
    %2090 = vmatprep.subr.mxu0 0.0
    %2091 = vmatpush1.msra.mxu0 0.0
    %2092 = vmatprep.subr.mxu0 0.0
    %2093 = vmatpush1.msra.mxu0 0.0
    %2094 = vmatprep.subr.mxu0 0.0
    %2095 = vmatpush1.msra.mxu0 0.0
    %2096 = vmatprep.subr.mxu0 0.0
    %2097 = vmatpush1.msra.mxu0 0.0
    %2098 = vmatprep.subr.mxu0 0.0
    %2099 = vmatpush1.msra.mxu0 0.0
    %2100 = vmatprep.subr.mxu0 0.0
    %2101 = vmatpush1.msra.mxu0 0.0
    %2102 = vmatprep.subr.mxu0 0.0
    %2103 = vmatpush1.msra.mxu0 0.0
    %2104 = vmatprep.subr.mxu0 0.0
    %2105 = vmatpush1.msra.mxu0 0.0
    %2106 = vmatprep.subr.mxu0 0.0
    %2107 = vmatpush1.msra.mxu0 0.0
    %2108 = vmatprep.subr.mxu0 0.0
    %2109 = vmatpush1.msra.mxu0 0.0
    %2110 = vmatprep.subr.mxu0 0.0
    %2111 = vmatpush1.msra.mxu0 0.0
    %2112 = vmatprep.subr.mxu0 0.0
    %2113 = vmatpush1.msra.mxu0 0.0
    %2114 = vmatprep.subr.mxu0 0.0
    %2115 = vmatpush1.msra.mxu0 0.0
    %2116 = vmatprep.subr.mxu0 0.0
    %2117 = vmatpush1.msra.mxu0 0.0
    %2118 = vmatprep.subr.mxu0 0.0
    %2119 = vmatpush1.msra.mxu0 0.0
    %2120 = vmatprep.subr.mxu0 0.0
    %2121 = vmatpush1.msra.mxu0 0.0
    %2122 = vmatprep.subr.mxu0 0.0
    %2123 = vmatpush1.msra.mxu0 0.0
    %2124 = vmatprep.subr.mxu0 0.0
    %2125 = vmatpush1.msra.mxu0 0.0
    %2126 = vmatprep.subr.mxu0 0.0
    %2127 = vmatpush1.msra.mxu0 0.0
    %2128 = vmatprep.mubr.f32.mxu0 0.0
    %2129 = vmatmul.mubr.f32.gmra.mrb[0].mxu0 %v2062
    %v2130 = vpop.f32.mrb[0].mxu0
    %v2131 = vadd.f32 0.0, %v2130
    %v2132 = vpop.f32.mrb[0].mxu0
    %2133 = vdwg.mxu0
    %v2134 = vld [vmem:[%s11] sm:$0xff]
    %v2135 = vld [vmem:[%s11 + $0x8] sm:$0xff]
    %v2136 = vld [vmem:[%s11 + $0x10] sm:$0xff]
    %v2137 = vld [vmem:[%s11 + $0x18] sm:$0xff]
    %v2138 = vld [vmem:[%s11 + $0x20] sm:$0xff]
    %v2139 = vld [vmem:[%s11 + $0x28] sm:$0xff]
    %v2140 = vld [vmem:[%s11 + $0x30] sm:$0xff]
    %v2141 = vld [vmem:[%s11 + $0x38] sm:$0xff]
    %v2142 = vld [vmem:[%s11 + $0x40] sm:$0xff]
    %v2143 = vld [vmem:[%s11 + $0x48] sm:$0xff]
    %v2144 = vld [vmem:[%s12] sm:$0x1]
    %v2146 = vlaneseq
    %v2147 = vshrl.u32 %v2146, 7
    %v2148 = vsub.s32 0, %v2147
    %v2149 = vrot.slane %v2144, %v2148
    %vm2151 = vcmask 654336
    %v2153 = vsel %vm2151, %v2131, 0
    %2155 = vmatprep.subr.mxu0 0.0
    %2156 = vmatpush1.msra.mxu0 %v2134
    %2157 = vmatprep.subr.mxu0 0.0
    %2158 = vmatpush1.msra.mxu0 %v2135
    %2159 = vmatprep.subr.mxu0 0.0
    %2160 = vmatpush1.msra.mxu0 %v2136
    %2161 = vmatprep.subr.mxu0 0.0
    %2162 = vmatpush1.msra.mxu0 %v2137
    %2163 = vmatprep.subr.mxu0 0.0
    %2164 = vmatpush1.msra.mxu0 %v2138
    %2165 = vmatprep.subr.mxu0 0.0
    %2166 = vmatpush1.msra.mxu0 %v2139
    %2167 = vmatprep.subr.mxu0 0.0
    %2168 = vmatpush1.msra.mxu0 %v2140
    %2169 = vmatprep.subr.mxu0 0.0
    %2170 = vmatpush1.msra.mxu0 %v2141
    %2171 = vmatprep.subr.mxu0 0.0
    %2172 = vmatpush1.msra.mxu0 %v2142
    %2173 = vmatprep.subr.mxu0 0.0
    %2174 = vmatpush1.msra.mxu0 %v2143
    %2175 = vmatprep.subr.mxu0 0.0
    %2176 = vmatpush1.msra.mxu0 0.0
    %2177 = vmatprep.subr.mxu0 0.0
    %2178 = vmatpush1.msra.mxu0 0.0
    %2179 = vmatprep.subr.mxu0 0.0
    %2180 = vmatpush1.msra.mxu0 0.0
    %2181 = vmatprep.subr.mxu0 0.0
    %2182 = vmatpush1.msra.mxu0 0.0
    %2183 = vmatprep.subr.mxu0 0.0
    %2184 = vmatpush1.msra.mxu0 0.0
    %2185 = vmatprep.subr.mxu0 0.0
    %2186 = vmatpush1.msra.mxu0 0.0
    %2187 = vmatprep.subr.mxu0 0.0
    %2188 = vmatpush1.msra.mxu0 0.0
    %2189 = vmatprep.subr.mxu0 0.0
    %2190 = vmatpush1.msra.mxu0 0.0
    %2191 = vmatprep.subr.mxu0 0.0
    %2192 = vmatpush1.msra.mxu0 0.0
    %2193 = vmatprep.subr.mxu0 0.0
    %2194 = vmatpush1.msra.mxu0 0.0
    %2195 = vmatprep.subr.mxu0 0.0
    %2196 = vmatpush1.msra.mxu0 0.0
    %2197 = vmatprep.subr.mxu0 0.0
    %2198 = vmatpush1.msra.mxu0 0.0
    %2199 = vmatprep.subr.mxu0 0.0
    %2200 = vmatpush1.msra.mxu0 0.0
    %2201 = vmatprep.subr.mxu0 0.0
    %2202 = vmatpush1.msra.mxu0 0.0
    %2203 = vmatprep.subr.mxu0 0.0
    %2204 = vmatpush1.msra.mxu0 0.0
    %2205 = vmatprep.subr.mxu0 0.0
    %2206 = vmatpush1.msra.mxu0 0.0
    %2207 = vmatprep.subr.mxu0 0.0
    %2208 = vmatpush1.msra.mxu0 0.0
    %2209 = vmatprep.subr.mxu0 0.0
    %2210 = vmatpush1.msra.mxu0 0.0
    %2211 = vmatprep.subr.mxu0 0.0
    %2212 = vmatpush1.msra.mxu0 0.0
    %2213 = vmatprep.subr.mxu0 0.0
    %2214 = vmatpush1.msra.mxu0 0.0
    %2215 = vmatprep.subr.mxu0 0.0
    %2216 = vmatpush1.msra.mxu0 0.0
    %2217 = vmatprep.subr.mxu0 0.0
    %2218 = vmatpush1.msra.mxu0 0.0
    %2219 = vmatprep.mubr.f32.mxu0 0.0
    %2220 = vmatmul.mubr.f32.gmra.mrb[0].mxu0 %v2153
    %v2221 = vpop.f32.mrb[0].mxu0
    %v2222 = vadd.f32 %v2149, %v2221
    %v2223 = vpop.f32.mrb[0].mxu0
    %2224 = vdwg.mxu0
    %vm2225 = vcmask 74752
    %2226 = vst.msk [vmem:[#allocation8] sm:$0x3] %vm2225, %v2222
    // Predicated region
    $region66: #{tpu_custom_call.1} parent=1 // pred_check
      _
    $region67: #{tpu_custom_call.1} parent=1 // pred_check_branch
      %2228 = sbr.rel (0) target = $region69
    $region68: #{tpu_custom_call.1} parent=1 // pred_region
      %s2230 = ssub.s32 32, 32
      %2231 = vsyncadd [#allocation4], %s2230
      %s2233 = sshll.u32 [#allocation8], 4
      %s2234 = int_to_ptr.vmem [resolvable:$true] %s2233
      %2236 = dma.vmem_to_hbm [thread:$0]  %s2234, 32, %s13, [#allocation4]
    $region69: #{tpu_custom_call.1} parent=1 // pred_fallthru
      _
    // Predicated region
    $region70: #{tpu_custom_call.1} parent=1 // pred_check
      _
    $region71: #{tpu_custom_call.1} parent=1 // pred_check_branch
      %2238 = sbr.rel (0) target = $region73
    $region72: #{tpu_custom_call.1} parent=1 // pred_region
      %2239 = dma.done [#allocation4], 32
    $region73: #{tpu_custom_call.1} parent=1 // pred_fallthru
      _
    %2240 = vsyncpa [#allocation3], 1
    %2241 = vsyncpa [#allocation6], 1
    %2242 = vsyncpa [#allocation4], 1

</llo_original>
